<compile_context>
chip_gen: v6e
topology: v6e:2x2x1
jax: 0.10.0
libtpu: 0.0.40
codegen_flags: <defaults>
</compile_context>

<pallas_src>
import functools

import numpy as np
import jax
import jax.numpy as jnp
from jax.experimental import pallas as pl
from jax.experimental.pallas import tpu as pltpu

EPS = 1e-5      # nn.BatchNorm1d default eps
LANE = 128      # TPU lane width


def _round_up(x, m):
    return (x + m - 1) // m * m


# ----------------------------- kernel helpers --------------------------------
def _mask_padded_rows(z, *, tile_b, batch):
    """Zero rows that belong to batch padding so they don't bias BN stats."""
    if batch % tile_b == 0:
        return z
    row = pl.program_id(0) * tile_b + jax.lax.broadcasted_iota(jnp.int32, z.shape, 0)
    return jnp.where(row < batch, z, 0.0)


def _layer1(h_u, p_d, p_v, e_t, e_v, w1a, w1b, b1):
    """z1 = relu([h_u+p_d, p_v+e_t+e_v] @ W1 + b1), W1 split row-wise (no concat)."""
    h_u_hat = h_u + p_d
    e_i_hat = p_v + e_t + e_v
    z1 = jnp.dot(h_u_hat, w1a, preferred_element_type=jnp.float32)
    z1 = z1 + jnp.dot(e_i_hat, w1b, preferred_element_type=jnp.float32)
    return jnp.maximum(z1 + b1, 0.0)


def _layer2(z1n, w2, b2):
    z2 = jnp.dot(z1n, w2, preferred_element_type=jnp.float32) + b2
    return jnp.maximum(z2, 0.0)


# ------------------------------ Pallas kernels --------------------------------
def _stats1_kernel(h_u_ref, p_d_ref, p_v_ref, e_t_ref, e_v_ref,
                   w1a_ref, w1b_ref, b1_ref,
                   s1_ref, q1_ref, *, tile_b, batch):
    z1 = _layer1(h_u_ref[...], p_d_ref[...], p_v_ref[...], e_t_ref[...],
                 e_v_ref[...], w1a_ref[...], w1b_ref[...], b1_ref[...])
    z1 = _mask_padded_rows(z1, tile_b=tile_b, batch=batch)
    s1_ref[0] = jnp.sum(z1, axis=0, keepdims=True)
    q1_ref[0] = jnp.sum(z1 * z1, axis=0, keepdims=True)


def _stats2_kernel(h_u_ref, p_d_ref, p_v_ref, e_t_ref, e_v_ref,
                   w1a_ref, w1b_ref, b1_ref, sc1_ref, sh1_ref,
                   w2_ref, b2_ref,
                   s2_ref, q2_ref, *, tile_b, batch):
    z1 = _layer1(h_u_ref[...], p_d_ref[...], p_v_ref[...], e_t_ref[...],
                 e_v_ref[...], w1a_ref[...], w1b_ref[...], b1_ref[...])
    z1n = z1 * sc1_ref[...] + sh1_ref[...]                 # folded BN (scale/shift)
    z2 = _layer2(z1n, w2_ref[...], b2_ref[...])
    z2 = _mask_padded_rows(z2, tile_b=tile_b, batch=batch)
    s2_ref[0] = jnp.sum(z2, axis=0, keepdims=True)
    q2_ref[0] = jnp.sum(z2 * z2, axis=0, keepdims=True)


def _final_kernel(h_u_ref, p_d_ref, p_v_ref, e_t_ref, e_v_ref,
                  w1a_ref, w1b_ref, b1_ref, sc1_ref, sh1_ref,
                  w2_ref, b2_ref, sc2_ref, sh2_ref, w3_ref, b3_ref,
                  pred_ref):
    z1 = _layer1(h_u_ref[...], p_d_ref[...], p_v_ref[...], e_t_ref[...],
                 e_v_ref[...], w1a_ref[...], w1b_ref[...], b1_ref[...])
    z1n = z1 * sc1_ref[...] + sh1_ref[...]
    z2 = _layer2(z1n, w2_ref[...], b2_ref[...])
    z2n = z2 * sc2_ref[...] + sh2_ref[...]
    # Final projection folded into a lane-dense (1, TILE_B) row:
    #   logits_row = w3_row @ z2n.T + b3   (no N=1 MXU matmul, no (B,1) masked store)
    logits = jnp.dot(w3_ref[...], z2n.T, preferred_element_type=jnp.float32)
    logits = logits + b3_ref[0, 0]
    pred_ref[0] = jax.nn.sigmoid(logits)


# ------------------------------ fused wrapper ---------------------------------
@functools.partial(jax.jit, static_argnames=("tile_b",))
def fused_prompt_mlp(h_u, p_d, p_v, e_t, e_v, kp, tile_b=1024):
    """Elementwise prompt fusion + 3-layer MLP with training-mode BatchNorm."""
    B, M = h_u.shape
    PM = kp["w1a"].shape[1]        # padded layer-1 width (multiple of 128)
    PH = kp["w2"].shape[1]         # padded layer-2 width (multiple of 128)

    tb = _round_up(min(tile_b, _round_up(B, 8)), 8)
    b_pad = _round_up(B, tb)
    num_tiles = b_pad // tb

    acts = [h_u, p_d, p_v, e_t, e_v]
    if b_pad != B:
        acts = [jnp.pad(a, ((0, b_pad - B), (0, 0))) for a in acts]

    act_spec = pl.BlockSpec((tb, M), lambda t: (t, 0))

    def const_spec(x):             # resident across all grid steps
        zeros = (0,) * x.ndim
        return pl.BlockSpec(x.shape, lambda t, _z=zeros: _z)

    cparams = pltpu.CompilerParams(
        dimension_semantics=("parallel",),        # v7x: shard batch tiles across TCs
        vmem_limit_bytes=32 * 1024 * 1024)

    # ---- pass 1: layer-1 activations + partial BN statistics ----
    w_in1 = (kp["w1a"], kp["w1b"], kp["b1"])
    s1, q1 = pl.pallas_call(
        functools.partial(_stats1_kernel, tile_b=tb, batch=B),
        grid=(num_tiles,),
        in_specs=[act_spec] * 5 + [const_spec(x) for x in w_in1],
        out_specs=[pl.BlockSpec((1, 1, PM), lambda t: (t, 0, 0))] * 2,
        out_shape=[jax.ShapeDtypeStruct((num_tiles, 1, PM), jnp.float32)] * 2,
        compiler_params=cparams,
    )(*acts, *w_in1)

    m1 = jnp.sum(s1, axis=0) / B                            # (1, PM)
    v1 = jnp.maximum(jnp.sum(q1, axis=0) / B - m1 * m1, 0.0)
    sc1 = kp["g1"] * jax.lax.rsqrt(v1 + EPS)                # gamma folded
    sh1 = kp["be1"] - m1 * sc1                              # beta folded

    # ---- pass 2: layer-2 activations + partial BN statistics ----
    w_in2 = w_in1 + (sc1, sh1, kp["w2"], kp["b2"])
    s2, q2 = pl.pallas_call(
        functools.partial(_stats2_kernel, tile_b=tb, batch=B),
        grid=(num_tiles,),
        in_specs=[act_spec] * 5 + [const_spec(x) for x in w_in2],
        out_specs=[pl.BlockSpec((1, 1, PH), lambda t: (t, 0, 0))] * 2,
        out_shape=[jax.ShapeDtypeStruct((num_tiles, 1, PH), jnp.float32)] * 2,
        compiler_params=cparams,
    )(*acts, *w_in2)

    m2 = jnp.sum(s2, axis=0) / B
    v2 = jnp.maximum(jnp.sum(q2, axis=0) / B - m2 * m2, 0.0)
    sc2 = kp["g2"] * jax.lax.rsqrt(v2 + EPS)
    sh2 = kp["be2"] - m2 * sc2

    # ---- pass 3: normalize, project, sigmoid; lane-dense (1, tb) output rows ----
    w_in3 = w_in2 + (sc2, sh2, kp["w3"])
    pred = pl.pallas_call(
        _final_kernel,
        grid=(num_tiles,),
        in_specs=([act_spec] * 5 + [const_spec(x) for x in w_in3]
                  + [pl.BlockSpec(memory_space=pltpu.MemorySpace.SMEM)]),
        out_specs=pl.BlockSpec((1, 1, tb), lambda t: (t, 0, 0)),
        out_shape=jax.ShapeDtypeStruct((num_tiles, 1, tb), jnp.float32),
        compiler_params=cparams,
    )(*acts, *w_in3, kp["b3"])

    return pred.reshape(b_pad)[:B]


# ------------------------------ model (glue) ----------------------------------
def init_params(key, *, user_num, item_num, domain_num, prompt_dim,
                multi_modal_dim, text_in=384, visual_in=768):
    M = multi_modal_dim
    H = M // 2
    ks = jax.random.split(key, 11)

    def xavier(k, shape):
        a = float(np.sqrt(6.0 / (shape[0] + shape[1])))
        return jax.random.uniform(k, shape, jnp.float32, -a, a)

    return {
        # PWLayer: bias starts at zero and dropout(p=0) is identity -> x @ W^T
        "w_text": 0.02 * jax.random.normal(ks[0], (text_in, M), jnp.float32),
        "w_visual": 0.02 * jax.random.normal(ks[1], (visual_in, M), jnp.float32),
        "domain_prompt": xavier(ks[2], (domain_num, prompt_dim)),
        "user_prompt": xavier(ks[3], (user_num, prompt_dim)),
        "item_prompt": xavier(ks[4], (item_num, prompt_dim)),
        # mlp_layer_1 (torch Linear(2M -> M)), stored transposed as (2M, M)
        "w1": 0.05 * jax.random.normal(ks[5], (2 * M, M), jnp.float32),
        "b1": 0.05 * jax.random.normal(ks[6], (M,), jnp.float32),
        "g1": jnp.ones((M,), jnp.float32),
        "be1": jnp.zeros((M,), jnp.float32),
        "w2": 0.05 * jax.random.normal(ks[7], (M, H), jnp.float32),
        "b2": 0.05 * jax.random.normal(ks[8], (H,), jnp.float32),
        "g2": jnp.ones((H,), jnp.float32),
        "be2": jnp.zeros((H,), jnp.float32),
        "w3": 0.05 * jax.random.normal(ks[9], (H,), jnp.float32),
        "b3": 0.05 * jax.random.normal(ks[10], (1,), jnp.float32),
    }


def prepare_kernel_params(params, lane=LANE):
    """Host-side, one-time: split/zero-pad weights & BN params to lane multiples."""
    M = params["w1"].shape[1]
    H = params["w2"].shape[1]
    PM = _round_up(M, lane)
    PH = _round_up(H, lane)

    def pad_cols(x, width):
        return jnp.pad(x, ((0, 0), (0, width - x.shape[1])))

    return {
        "w1a": pad_cols(params["w1"][:M], PM),        # rows that multiply h_u_hat
        "w1b": pad_cols(params["w1"][M:], PM),        # rows that multiply e_i_hat
        "b1": pad_cols(params["b1"][None, :], PM),
        "g1": pad_cols(params["g1"][None, :], PM),    # padded gamma/beta are zero
        "be1": pad_cols(params["be1"][None, :], PM),  #  -> padded lanes stay 0
        "w2": jnp.pad(params["w2"], ((0, PM - M), (0, PH - H))),
        "b2": pad_cols(params["b2"][None, :], PH),
        "g2": pad_cols(params["g2"][None, :], PH),
        "be2": pad_cols(params["be2"][None, :], PH),
        "w3": pad_cols(params["w3"][None, :], PH),    # (1, PH) row vector
        "b3": params["b3"].reshape(1, 1),             # SMEM scalar
    }


def compute_h_u(nodes_u, nodes_v, user_inter_dict, top_n_index, prototypes, item_num):
    """Ragged per-user prototype aggregation (host/numpy glue).
    TODO(synk): torch.unique over variable-length interaction sets is
    data-dependent ragged work with no clean static-shape Pallas equivalent."""
    top_n_np = np.asarray(top_n_index)
    protos_np = np.asarray(prototypes)
    rows = []
    for u, v in zip(np.asarray(nodes_u).tolist(), np.asarray(nodes_v).tolist()):
        inter = np.array([x for x in user_inter_dict[u] if x != v], dtype=np.int64)
        idx_t = top_n_np[inter]                 # (len, n)
        idx_v = top_n_np[inter + item_num]      # (len, n)
        merge = np.unique(np.concatenate([idx_t.flatten(), idx_v.flatten()]))
        rows.append(protos_np[merge].mean(axis=0))
    return jnp.asarray(np.stack(rows), dtype=jnp.float32)


def mpf_mdr_forward(params, kparams, nodes_u, nodes_v, nodes_d, top_n_index,
                    prototypes, *, user_inter_dict, item_num,
                    text_features, visual_features, tile_b=1024):
    p_u = params["user_prompt"][nodes_u]
    p_v = params["item_prompt"][nodes_v]
    p_d = params["domain_prompt"][nodes_d]
    h_u = compute_h_u(nodes_u, nodes_v, user_inter_dict, top_n_index,
                      prototypes, item_num)
    e_t = text_features[nodes_v]
    e_v = visual_features[nodes_v]
    pred = fused_prompt_mlp(h_u, p_d, p_v, e_t, e_v, kparams, tile_b=tile_b)
    return pred, p_u, h_u, p_d    # pred already squeezed to (B,)


# pure-JAX reference of the fused path (for correctness checks)
def _reference_mlp(h_u, p_d, p_v, e_t, e_v, p):
    hp = jax.lax.Precision.HIGHEST
    inter = jnp.concatenate([h_u + p_d, p_v + e_t + e_v], axis=1)
    z1 = jnp.maximum(jnp.dot(inter, p["w1"], precision=hp) + p["b1"], 0.0)
    m1 = z1.mean(0, keepdims=True)
    v1 = ((z1 - m1) ** 2).mean(0, keepdims=True)
    z1 = (z1 - m1) / jnp.sqrt(v1 + EPS) * p["g1"] + p["be1"]
    z2 = jnp.maximum(jnp.dot(z1, p["w2"], precision=hp) + p["b2"], 0.0)
    m2 = z2.mean(0, keepdims=True)
    v2 = ((z2 - m2) ** 2).mean(0, keepdims=True)
    z2 = (z2 - m2) / jnp.sqrt(v2 + EPS) * p["g2"] + p["be2"]
    logits = jnp.dot(z2, p["w3"][:, None], precision=hp)[:, 0] + p["b3"][0]
    return jax.nn.sigmoid(logits)


if __name__ == "__main__":
    # --- small deterministic configuration ---
    user_num, item_num, domain_num = 8, 16, 3
    multi_modal_dim = 32
    prompt_dim = multi_modal_dim       # required: h_u + p_d and p_v + e_t + e_v
    proto_num, top_n = 8, 2
    B = 8

    key = jax.random.PRNGKey(0)
    k_par, k_txt, k_vis, k_proto, k_big = jax.random.split(key, 5)

    params = init_params(k_par, user_num=user_num, item_num=item_num,
                         domain_num=domain_num, prompt_dim=prompt_dim,
                         multi_modal_dim=multi_modal_dim)
    kparams = prepare_kernel_params(params)

    # PWLayer projections of pre-trained modal features (init-time glue)
    pre_text = jax.random.normal(k_txt, (item_num, 384), jnp.float32)
    pre_visual = jax.random.normal(k_vis, (item_num, 768), jnp.float32)
    text_features = pre_text @ params["w_text"]          # bias=0, dropout=identity
    visual_features = pre_visual @ params["w_visual"]
    multi_modal_features = jnp.concatenate([text_features, visual_features], axis=0)

    # prototypes + top-n similar prototypes (forward inputs, computed in glue)
    prototypes = jax.random.normal(k_proto, (proto_num, multi_modal_dim), jnp.float32)
    sim = multi_modal_features @ prototypes.T
    _, top_n_index = jax.lax.top_k(sim, top_n)           # (2*item_num, n)

    # deterministic user interaction dict (each user has 4 distinct items)
    user_inter_dict = {u: [u % item_num, (u + 3) % item_num,
                           (u + 7) % item_num, (u + 11) % item_num]
                       for u in range(user_num)}

    # batch inputs
    nodes_u = jnp.arange(B, dtype=jnp.int32) % user_num
    nodes_v = (jnp.arange(B, dtype=jnp.int32) * 3 + 1) % item_num
    nodes_d = jnp.arange(B, dtype=jnp.int32) % domain_num

    pred, p_u, h_u, p_d = mpf_mdr_forward(
        params, kparams, nodes_u, nodes_v, nodes_d, top_n_index, prototypes,
        user_inter_dict=user_inter_dict, item_num=item_num,
        text_features=text_features, visual_features=visual_features)
    jax.block_until_ready(pred)

    # correctness vs pure-JAX reference (single-tile path)
    p_v = params["item_prompt"][nodes_v]
    e_t = text_features[nodes_v]
    e_v = visual_features[nodes_v]
    ref = _reference_mlp(h_u, p_d, p_v, e_t, e_v, params)
    np.testing.assert_allclose(np.asarray(pred), np.asarray(ref),
                               rtol=1e-4, atol=2e-5)
    assert pred.shape == (B,) and p_u.shape == (B, prompt_dim)
    assert h_u.shape == (B, multi_modal_dim) and p_d.shape == (B, prompt_dim)

    # correctness of the tiled path (multi-tile grid + remainder-row masking)
    B2 = 300
    ks = jax.random.split(k_big, 5)
    acts2 = [0.5 * jax.random.normal(ks[i], (B2, multi_modal_dim), jnp.float32)
             for i in range(5)]
    pred2 = fused_prompt_mlp(*acts2, kparams, tile_b=64)
    jax.block_until_ready(pred2)
    ref2 = _reference_mlp(*acts2, params)
    np.testing.assert_allclose(np.asarray(pred2), np.asarray(ref2),
                               rtol=1e-4, atol=2e-5)

    print("KERNEL_OK")
</pallas_src>

<mosaic_0001>
module attributes {stable_mosaic.version = 11 : i64} {
  func.func @_stats2_kernel(%arg0: i32, %arg1: memref<8x32xf32, #tpu.memory_space<vmem>>, %arg2: memref<8x32xf32, #tpu.memory_space<vmem>>, %arg3: memref<8x32xf32, #tpu.memory_space<vmem>>, %arg4: memref<8x32xf32, #tpu.memory_space<vmem>>, %arg5: memref<8x32xf32, #tpu.memory_space<vmem>>, %arg6: memref<32x128xf32, #tpu.memory_space<vmem>>, %arg7: memref<32x128xf32, #tpu.memory_space<vmem>>, %arg8: memref<1x128xf32, #tpu.memory_space<vmem>>, %arg9: memref<1x128xf32, #tpu.memory_space<vmem>>, %arg10: memref<1x128xf32, #tpu.memory_space<vmem>>, %arg11: memref<128x128xf32, #tpu.memory_space<vmem>>, %arg12: memref<1x128xf32, #tpu.memory_space<vmem>>, %arg13: memref<1x1x128xf32, #tpu.memory_space<vmem>>, %arg14: memref<1x1x128xf32, #tpu.memory_space<vmem>>) attributes {dimension_semantics = [#tpu.dimension_semantics<parallel>], iteration_bounds = array<i64: 1>, scalar_prefetch = 0 : i64, scratch_operands = 0 : i64, tpu.core_type = #tpu.core_type<tc>, window_params = [{transform_indices = @transform_0, window_bounds = array<i64: 8, 32>}, {transform_indices = @transform_1, window_bounds = array<i64: 8, 32>}, {transform_indices = @transform_2, window_bounds = array<i64: 8, 32>}, {transform_indices = @transform_3, window_bounds = array<i64: 8, 32>}, {transform_indices = @transform_4, window_bounds = array<i64: 8, 32>}, {pipeline_mode = #tpu.pipeline_mode<synchronous>, transform_indices = @transform_5, window_bounds = array<i64: 32, 128>}, {pipeline_mode = #tpu.pipeline_mode<synchronous>, transform_indices = @transform_6, window_bounds = array<i64: 32, 128>}, {pipeline_mode = #tpu.pipeline_mode<synchronous>, transform_indices = @transform_7, window_bounds = array<i64: 1, 128>}, {pipeline_mode = #tpu.pipeline_mode<synchronous>, transform_indices = @transform_8, window_bounds = array<i64: 1, 128>}, {pipeline_mode = #tpu.pipeline_mode<synchronous>, transform_indices = @transform_9, window_bounds = array<i64: 1, 128>}, {pipeline_mode = #tpu.pipeline_mode<synchronous>, transform_indices = @transform_10, window_bounds = array<i64: 128, 128>}, {pipeline_mode = #tpu.pipeline_mode<synchronous>, transform_indices = @transform_11, window_bounds = array<i64: 1, 128>}, {transform_indices = @transform_12, window_bounds = array<i64: 1, 1, 128>}, {transform_indices = @transform_13, window_bounds = array<i64: 1, 1, 128>}]} {
    %c0 = arith.constant 0 : index
    %c0_0 = arith.constant 0 : index
    %0 = vector.load %arg1[%c0, %c0_0] : memref<8x32xf32, #tpu.memory_space<vmem>>, vector<8x32xf32>
    %c0_1 = arith.constant 0 : index
    %c0_2 = arith.constant 0 : index
    %1 = vector.load %arg2[%c0_1, %c0_2] : memref<8x32xf32, #tpu.memory_space<vmem>>, vector<8x32xf32>
    %c0_3 = arith.constant 0 : index
    %c0_4 = arith.constant 0 : index
    %2 = vector.load %arg3[%c0_3, %c0_4] : memref<8x32xf32, #tpu.memory_space<vmem>>, vector<8x32xf32>
    %c0_5 = arith.constant 0 : index
    %c0_6 = arith.constant 0 : index
    %3 = vector.load %arg4[%c0_5, %c0_6] : memref<8x32xf32, #tpu.memory_space<vmem>>, vector<8x32xf32>
    %c0_7 = arith.constant 0 : index
    %c0_8 = arith.constant 0 : index
    %4 = vector.load %arg5[%c0_7, %c0_8] : memref<8x32xf32, #tpu.memory_space<vmem>>, vector<8x32xf32>
    %c0_9 = arith.constant 0 : index
    %c0_10 = arith.constant 0 : index
    %5 = vector.load %arg6[%c0_9, %c0_10] : memref<32x128xf32, #tpu.memory_space<vmem>>, vector<32x128xf32>
    %c0_11 = arith.constant 0 : index
    %c0_12 = arith.constant 0 : index
    %6 = vector.load %arg7[%c0_11, %c0_12] : memref<32x128xf32, #tpu.memory_space<vmem>>, vector<32x128xf32>
    %c0_13 = arith.constant 0 : index
    %c0_14 = arith.constant 0 : index
    %7 = vector.load %arg8[%c0_13, %c0_14] : memref<1x128xf32, #tpu.memory_space<vmem>>, vector<1x128xf32>
    %8 = arith.addf %0, %1 : vector<8x32xf32>
    %9 = arith.addf %2, %3 : vector<8x32xf32>
    %10 = arith.addf %9, %4 : vector<8x32xf32>
    %cst = arith.constant dense<0.000000e+00> : vector<8x128xf32>
    %11 = tpu.matmul %8, %5, %cst {dimension_numbers = #tpu.dot_dimension_numbers<[1], [0], [0], [1], [0, 0, 1, 1], [], []>} : vector<8x32xf32>, vector<32x128xf32>, vector<8x128xf32> -> vector<8x128xf32>
    %cst_15 = arith.constant dense<0.000000e+00> : vector<8x128xf32>
    %12 = tpu.matmul %10, %6, %cst_15 {dimension_numbers = #tpu.dot_dimension_numbers<[1], [0], [0], [1], [0, 0, 1, 1], [], []>} : vector<8x32xf32>, vector<32x128xf32>, vector<8x128xf32> -> vector<8x128xf32>
    %13 = arith.addf %11, %12 : vector<8x128xf32>
    %14 = vector.broadcast %7 : vector<1x128xf32> to vector<8x128xf32>
    %15 = arith.addf %13, %14 : vector<8x128xf32>
    %cst_16 = arith.constant 0.000000e+00 : f32
    %16 = vector.broadcast %cst_16 : f32 to vector<8x128xf32>
    %17 = arith.maximumf %15, %16 : vector<8x128xf32>
    %c0_17 = arith.constant 0 : index
    %c0_18 = arith.constant 0 : index
    %18 = vector.load %arg9[%c0_17, %c0_18] : memref<1x128xf32, #tpu.memory_space<vmem>>, vector<1x128xf32>
    %19 = vector.broadcast %18 : vector<1x128xf32> to vector<8x128xf32>
    %20 = arith.mulf %17, %19 : vector<8x128xf32>
    %c0_19 = arith.constant 0 : index
    %c0_20 = arith.constant 0 : index
    %21 = vector.load %arg10[%c0_19, %c0_20] : memref<1x128xf32, #tpu.memory_space<vmem>>, vector<1x128xf32>
    %22 = vector.broadcast %21 : vector<1x128xf32> to vector<8x128xf32>
    %23 = arith.addf %20, %22 : vector<8x128xf32>
    %c0_21 = arith.constant 0 : index
    %c0_22 = arith.constant 0 : index
    %24 = vector.load %arg11[%c0_21, %c0_22] : memref<128x128xf32, #tpu.memory_space<vmem>>, vector<128x128xf32>
    %c0_23 = arith.constant 0 : index
    %c0_24 = arith.constant 0 : index
    %25 = vector.load %arg12[%c0_23, %c0_24] : memref<1x128xf32, #tpu.memory_space<vmem>>, vector<1x128xf32>
    %cst_25 = arith.constant dense<0.000000e+00> : vector<8x128xf32>
    %26 = tpu.matmul %23, %24, %cst_25 {dimension_numbers = #tpu.dot_dimension_numbers<[1], [0], [0], [1], [0, 0, 1, 1], [], []>} : vector<8x128xf32>, vector<128x128xf32>, vector<8x128xf32> -> vector<8x128xf32>
    %27 = vector.broadcast %25 : vector<1x128xf32> to vector<8x128xf32>
    %28 = arith.addf %26, %27 : vector<8x128xf32>
    %cst_26 = arith.constant 0.000000e+00 : f32
    %29 = vector.broadcast %cst_26 : f32 to vector<8x128xf32>
    %30 = arith.maximumf %28, %29 : vector<8x128xf32>
    %cst_27 = arith.constant dense<0.000000e+00> : vector<128xf32>
    %31 = vector.multi_reduction <add>, %30, %cst_27 [0] : vector<8x128xf32> to vector<128xf32>
    %32 = vector.shape_cast %31 : vector<128xf32> to vector<1x128xf32>
    %c0_28 = arith.constant 0 : index
    %c0_29 = arith.constant 0 : index
    %c0_30 = arith.constant 0 : index
    %33 = vector.load %arg13[%c0_28, %c0_29, %c0_30] : memref<1x1x128xf32, #tpu.memory_space<vmem>>, vector<1x1x128xf32>
    %34 = vector.shape_cast %33 : vector<1x1x128xf32> to vector<1x128xf32>
    %35 = vector.shape_cast %32 : vector<1x128xf32> to vector<1x1x128xf32>
    tpu.vector_store %arg13[%c0_28, %c0_29, %c0_30], %35 {strides = array<i32>} : memref<1x1x128xf32, #tpu.memory_space<vmem>>, vector<1x1x128xf32>,
    %36 = arith.mulf %30, %30 : vector<8x128xf32>
    %cst_31 = arith.constant dense<0.000000e+00> : vector<128xf32>
    %37 = vector.multi_reduction <add>, %36, %cst_31 [0] : vector<8x128xf32> to vector<128xf32>
    %38 = vector.shape_cast %37 : vector<128xf32> to vector<1x128xf32>
    %c0_32 = arith.constant 0 : index
    %c0_33 = arith.constant 0 : index
    %c0_34 = arith.constant 0 : index
    %39 = vector.load %arg14[%c0_32, %c0_33, %c0_34] : memref<1x1x128xf32, #tpu.memory_space<vmem>>, vector<1x1x128xf32>
    %40 = vector.shape_cast %39 : vector<1x1x128xf32> to vector<1x128xf32>
    %41 = vector.shape_cast %38 : vector<1x128xf32> to vector<1x1x128xf32>
    tpu.vector_store %arg14[%c0_32, %c0_33, %c0_34], %41 {strides = array<i32>} : memref<1x1x128xf32, #tpu.memory_space<vmem>>, vector<1x1x128xf32>,
    return
  }
  func.func @transform_0(%arg0: i32) -> (i32, i32) {
    %c0_i32 = arith.constant 0 : i32
    %c0_i32_0 = arith.constant 0 : i32
    return %arg0, %c0_i32 : i32, i32
  }
  func.func @transform_1(%arg0: i32) -> (i32, i32) {
    %c0_i32 = arith.constant 0 : i32
    %c0_i32_0 = arith.constant 0 : i32
    return %arg0, %c0_i32 : i32, i32
  }
  func.func @transform_2(%arg0: i32) -> (i32, i32) {
    %c0_i32 = arith.constant 0 : i32
    %c0_i32_0 = arith.constant 0 : i32
    return %arg0, %c0_i32 : i32, i32
  }
  func.func @transform_3(%arg0: i32) -> (i32, i32) {
    %c0_i32 = arith.constant 0 : i32
    %c0_i32_0 = arith.constant 0 : i32
    return %arg0, %c0_i32 : i32, i32
  }
  func.func @transform_4(%arg0: i32) -> (i32, i32) {
    %c0_i32 = arith.constant 0 : i32
    %c0_i32_0 = arith.constant 0 : i32
    return %arg0, %c0_i32 : i32, i32
  }
  func.func @transform_5(%arg0: i32) -> (i32, i32) {
    %c0_i32 = arith.constant 0 : i32
    %c0_i32_0 = arith.constant 0 : i32
    %c0_i32_1 = arith.constant 0 : i32
    return %c0_i32, %c0_i32_0 : i32, i32
  }
  func.func @transform_6(%arg0: i32) -> (i32, i32) {
    %c0_i32 = arith.constant 0 : i32
    %c0_i32_0 = arith.constant 0 : i32
    %c0_i32_1 = arith.constant 0 : i32
    return %c0_i32, %c0_i32_0 : i32, i32
  }
  func.func @transform_7(%arg0: i32) -> (i32, i32) {
    %c0_i32 = arith.constant 0 : i32
    %c0_i32_0 = arith.constant 0 : i32
    %c0_i32_1 = arith.constant 0 : i32
    return %c0_i32, %c0_i32_0 : i32, i32
  }
  func.func @transform_8(%arg0: i32) -> (i32, i32) {
    %c0_i32 = arith.constant 0 : i32
    %c0_i32_0 = arith.constant 0 : i32
    %c0_i32_1 = arith.constant 0 : i32
    return %c0_i32, %c0_i32_0 : i32, i32
  }
  func.func @transform_9(%arg0: i32) -> (i32, i32) {
    %c0_i32 = arith.constant 0 : i32
    %c0_i32_0 = arith.constant 0 : i32
    %c0_i32_1 = arith.constant 0 : i32
    return %c0_i32, %c0_i32_0 : i32, i32
  }
  func.func @transform_10(%arg0: i32) -> (i32, i32) {
    %c0_i32 = arith.constant 0 : i32
    %c0_i32_0 = arith.constant 0 : i32
    %c0_i32_1 = arith.constant 0 : i32
    return %c0_i32, %c0_i32_0 : i32, i32
  }
  func.func @transform_11(%arg0: i32) -> (i32, i32) {
    %c0_i32 = arith.constant 0 : i32
    %c0_i32_0 = arith.constant 0 : i32
    %c0_i32_1 = arith.constant 0 : i32
    return %c0_i32, %c0_i32_0 : i32, i32
  }
  func.func @transform_12(%arg0: i32) -> (i32, i32, i32) {
    %c0_i32 = arith.constant 0 : i32
    %c0_i32_0 = arith.constant 0 : i32
    %c0_i32_1 = arith.constant 0 : i32
    return %arg0, %c0_i32, %c0_i32_0 : i32, i32, i32
  }
  func.func @transform_13(%arg0: i32) -> (i32, i32, i32) {
    %c0_i32 = arith.constant 0 : i32
    %c0_i32_0 = arith.constant 0 : i32
    %c0_i32_1 = arith.constant 0 : i32
    return %arg0, %c0_i32, %c0_i32_0 : i32, i32, i32
  }
}

module attributes {stable_mosaic.version = 11 : i64} {
  func.func @_final_kernel(%arg0: i32, %arg1: memref<8x32xf32, #tpu.memory_space<vmem>>, %arg2: memref<8x32xf32, #tpu.memory_space<vmem>>, %arg3: memref<8x32xf32, #tpu.memory_space<vmem>>, %arg4: memref<8x32xf32, #tpu.memory_space<vmem>>, %arg5: memref<8x32xf32, #tpu.memory_space<vmem>>, %arg6: memref<32x128xf32, #tpu.memory_space<vmem>>, %arg7: memref<32x128xf32, #tpu.memory_space<vmem>>, %arg8: memref<1x128xf32, #tpu.memory_space<vmem>>, %arg9: memref<1x128xf32, #tpu.memory_space<vmem>>, %arg10: memref<1x128xf32, #tpu.memory_space<vmem>>, %arg11: memref<128x128xf32, #tpu.memory_space<vmem>>, %arg12: memref<1x128xf32, #tpu.memory_space<vmem>>, %arg13: memref<1x128xf32, #tpu.memory_space<vmem>>, %arg14: memref<1x128xf32, #tpu.memory_space<vmem>>, %arg15: memref<1x128xf32, #tpu.memory_space<vmem>>, %arg16: memref<1x1xf32, #tpu.memory_space<smem>>, %arg17: memref<1x1x8xf32, #tpu.memory_space<vmem>>) attributes {dimension_semantics = [#tpu.dimension_semantics<parallel>], iteration_bounds = array<i64: 1>, scalar_prefetch = 0 : i64, scratch_operands = 0 : i64, tpu.core_type = #tpu.core_type<tc>, window_params = [{transform_indices = @transform_0, window_bounds = array<i64: 8, 32>}, {transform_indices = @transform_1, window_bounds = array<i64: 8, 32>}, {transform_indices = @transform_2, window_bounds = array<i64: 8, 32>}, {transform_indices = @transform_3, window_bounds = array<i64: 8, 32>}, {transform_indices = @transform_4, window_bounds = array<i64: 8, 32>}, {pipeline_mode = #tpu.pipeline_mode<synchronous>, transform_indices = @transform_5, window_bounds = array<i64: 32, 128>}, {pipeline_mode = #tpu.pipeline_mode<synchronous>, transform_indices = @transform_6, window_bounds = array<i64: 32, 128>}, {pipeline_mode = #tpu.pipeline_mode<synchronous>, transform_indices = @transform_7, window_bounds = array<i64: 1, 128>}, {pipeline_mode = #tpu.pipeline_mode<synchronous>, transform_indices = @transform_8, window_bounds = array<i64: 1, 128>}, {pipeline_mode = #tpu.pipeline_mode<synchronous>, transform_indices = @transform_9, window_bounds = array<i64: 1, 128>}, {pipeline_mode = #tpu.pipeline_mode<synchronous>, transform_indices = @transform_10, window_bounds = array<i64: 128, 128>}, {pipeline_mode = #tpu.pipeline_mode<synchronous>, transform_indices = @transform_11, window_bounds = array<i64: 1, 128>}, {pipeline_mode = #tpu.pipeline_mode<synchronous>, transform_indices = @transform_12, window_bounds = array<i64: 1, 128>}, {pipeline_mode = #tpu.pipeline_mode<synchronous>, transform_indices = @transform_13, window_bounds = array<i64: 1, 128>}, {pipeline_mode = #tpu.pipeline_mode<synchronous>, transform_indices = @transform_14, window_bounds = array<i64: 1, 128>}, {transform_indices = @transform_15, window_bounds = array<i64: 1, 1>}, {transform_indices = @transform_16, window_bounds = array<i64: 1, 1, 8>}]} {
    %c0 = arith.constant 0 : index
    %c0_0 = arith.constant 0 : index
    %0 = vector.load %arg1[%c0, %c0_0] : memref<8x32xf32, #tpu.memory_space<vmem>>, vector<8x32xf32>
    %c0_1 = arith.constant 0 : index
    %c0_2 = arith.constant 0 : index
    %1 = vector.load %arg2[%c0_1, %c0_2] : memref<8x32xf32, #tpu.memory_space<vmem>>, vector<8x32xf32>
    %c0_3 = arith.constant 0 : index
    %c0_4 = arith.constant 0 : index
    %2 = vector.load %arg3[%c0_3, %c0_4] : memref<8x32xf32, #tpu.memory_space<vmem>>, vector<8x32xf32>
    %c0_5 = arith.constant 0 : index
    %c0_6 = arith.constant 0 : index
    %3 = vector.load %arg4[%c0_5, %c0_6] : memref<8x32xf32, #tpu.memory_space<vmem>>, vector<8x32xf32>
    %c0_7 = arith.constant 0 : index
    %c0_8 = arith.constant 0 : index
    %4 = vector.load %arg5[%c0_7, %c0_8] : memref<8x32xf32, #tpu.memory_space<vmem>>, vector<8x32xf32>
    %c0_9 = arith.constant 0 : index
    %c0_10 = arith.constant 0 : index
    %5 = vector.load %arg6[%c0_9, %c0_10] : memref<32x128xf32, #tpu.memory_space<vmem>>, vector<32x128xf32>
    %c0_11 = arith.constant 0 : index
    %c0_12 = arith.constant 0 : index
    %6 = vector.load %arg7[%c0_11, %c0_12] : memref<32x128xf32, #tpu.memory_space<vmem>>, vector<32x128xf32>
    %c0_13 = arith.constant 0 : index
    %c0_14 = arith.constant 0 : index
    %7 = vector.load %arg8[%c0_13, %c0_14] : memref<1x128xf32, #tpu.memory_space<vmem>>, vector<1x128xf32>
    %8 = arith.addf %0, %1 : vector<8x32xf32>
    %9 = arith.addf %2, %3 : vector<8x32xf32>
    %10 = arith.addf %9, %4 : vector<8x32xf32>
    %cst = arith.constant dense<0.000000e+00> : vector<8x128xf32>
    %11 = tpu.matmul %8, %5, %cst {dimension_numbers = #tpu.dot_dimension_numbers<[1], [0], [0], [1], [0, 0, 1, 1], [], []>} : vector<8x32xf32>, vector<32x128xf32>, vector<8x128xf32> -> vector<8x128xf32>
    %cst_15 = arith.constant dense<0.000000e+00> : vector<8x128xf32>
    %12 = tpu.matmul %10, %6, %cst_15 {dimension_numbers = #tpu.dot_dimension_numbers<[1], [0], [0], [1], [0, 0, 1, 1], [], []>} : vector<8x32xf32>, vector<32x128xf32>, vector<8x128xf32> -> vector<8x128xf32>
    %13 = arith.addf %11, %12 : vector<8x128xf32>
    %14 = vector.broadcast %7 : vector<1x128xf32> to vector<8x128xf32>
    %15 = arith.addf %13, %14 : vector<8x128xf32>
    %cst_16 = arith.constant 0.000000e+00 : f32
    %16 = vector.broadcast %cst_16 : f32 to vector<8x128xf32>
    %17 = arith.maximumf %15, %16 : vector<8x128xf32>
    %c0_17 = arith.constant 0 : index
    %c0_18 = arith.constant 0 : index
    %18 = vector.load %arg9[%c0_17, %c0_18] : memref<1x128xf32, #tpu.memory_space<vmem>>, vector<1x128xf32>
    %19 = vector.broadcast %18 : vector<1x128xf32> to vector<8x128xf32>
    %20 = arith.mulf %17, %19 : vector<8x128xf32>
    %c0_19 = arith.constant 0 : index
    %c0_20 = arith.constant 0 : index
    %21 = vector.load %arg10[%c0_19, %c0_20] : memref<1x128xf32, #tpu.memory_space<vmem>>, vector<1x128xf32>
    %22 = vector.broadcast %21 : vector<1x128xf32> to vector<8x128xf32>
    %23 = arith.addf %20, %22 : vector<8x128xf32>
    %c0_21 = arith.constant 0 : index
    %c0_22 = arith.constant 0 : index
    %24 = vector.load %arg11[%c0_21, %c0_22] : memref<128x128xf32, #tpu.memory_space<vmem>>, vector<128x128xf32>
    %c0_23 = arith.constant 0 : index
    %c0_24 = arith.constant 0 : index
    %25 = vector.load %arg12[%c0_23, %c0_24] : memref<1x128xf32, #tpu.memory_space<vmem>>, vector<1x128xf32>
    %cst_25 = arith.constant dense<0.000000e+00> : vector<8x128xf32>
    %26 = tpu.matmul %23, %24, %cst_25 {dimension_numbers = #tpu.dot_dimension_numbers<[1], [0], [0], [1], [0, 0, 1, 1], [], []>} : vector<8x128xf32>, vector<128x128xf32>, vector<8x128xf32> -> vector<8x128xf32>
    %27 = vector.broadcast %25 : vector<1x128xf32> to vector<8x128xf32>
    %28 = arith.addf %26, %27 : vector<8x128xf32>
    %cst_26 = arith.constant 0.000000e+00 : f32
    %29 = vector.broadcast %cst_26 : f32 to vector<8x128xf32>
    %30 = arith.maximumf %28, %29 : vector<8x128xf32>
    %c0_27 = arith.constant 0 : index
    %c0_28 = arith.constant 0 : index
    %31 = vector.load %arg13[%c0_27, %c0_28] : memref<1x128xf32, #tpu.memory_space<vmem>>, vector<1x128xf32>
    %32 = vector.broadcast %31 : vector<1x128xf32> to vector<8x128xf32>
    %33 = arith.mulf %30, %32 : vector<8x128xf32>
    %c0_29 = arith.constant 0 : index
    %c0_30 = arith.constant 0 : index
    %34 = vector.load %arg14[%c0_29, %c0_30] : memref<1x128xf32, #tpu.memory_space<vmem>>, vector<1x128xf32>
    %35 = vector.broadcast %34 : vector<1x128xf32> to vector<8x128xf32>
    %36 = arith.addf %33, %35 : vector<8x128xf32>
    %c0_31 = arith.constant 0 : index
    %c0_32 = arith.constant 0 : index
    %37 = vector.load %arg15[%c0_31, %c0_32] : memref<1x128xf32, #tpu.memory_space<vmem>>, vector<1x128xf32>
    %38 = tpu.transpose %36, [1, 0] : vector<8x128xf32> -> vector<128x8xf32>
    %cst_33 = arith.constant dense<0.000000e+00> : vector<1x8xf32>
    %39 = tpu.matmul %37, %38, %cst_33 {dimension_numbers = #tpu.dot_dimension_numbers<[1], [0], [0], [1], [0, 0, 1, 1], [], []>} : vector<1x128xf32>, vector<128x8xf32>, vector<1x8xf32> -> vector<1x8xf32>
    %c0_34 = arith.constant 0 : index
    %c0_35 = arith.constant 0 : index
    %40 = memref.load %arg16[%c0_34, %c0_35] : memref<1x1xf32, #tpu.memory_space<smem>>
    %41 = vector.broadcast %40 : f32 to vector<1x8xf32>
    %42 = arith.addf %39, %41 : vector<1x8xf32>
    %43 = arith.negf %42 : vector<1x8xf32>
    %44 = math.exp %43 : vector<1x8xf32>
    %cst_36 = arith.constant 1.000000e+00 : f32
    %45 = vector.broadcast %cst_36 : f32 to vector<1x8xf32>
    %46 = arith.addf %45, %44 : vector<1x8xf32>
    %47 = arith.divf %45, %46 : vector<1x8xf32>
    %c0_37 = arith.constant 0 : index
    %c0_38 = arith.constant 0 : index
    %c0_39 = arith.constant 0 : index
    %48 = vector.load %arg17[%c0_37, %c0_38, %c0_39] : memref<1x1x8xf32, #tpu.memory_space<vmem>>, vector<1x1x8xf32>
    %49 = vector.shape_cast %48 : vector<1x1x8xf32> to vector<1x8xf32>
    %50 = vector.shape_cast %47 : vector<1x8xf32> to vector<1x1x8xf32>
    tpu.vector_store %arg17[%c0_37, %c0_38, %c0_39], %50 {strides = array<i32>} : memref<1x1x8xf32, #tpu.memory_space<vmem>>, vector<1x1x8xf32>,
    return
  }
  func.func @transform_0(%arg0: i32) -> (i32, i32) {
    %c0_i32 = arith.constant 0 : i32
    %c0_i32_0 = arith.constant 0 : i32
    return %arg0, %c0_i32 : i32, i32
  }
  func.func @transform_1(%arg0: i32) -> (i32, i32) {
    %c0_i32 = arith.constant 0 : i32
    %c0_i32_0 = arith.constant 0 : i32
    return %arg0, %c0_i32 : i32, i32
  }
  func.func @transform_2(%arg0: i32) -> (i32, i32) {
    %c0_i32 = arith.constant 0 : i32
    %c0_i32_0 = arith.constant 0 : i32
    return %arg0, %c0_i32 : i32, i32
  }
  func.func @transform_3(%arg0: i32) -> (i32, i32) {
    %c0_i32 = arith.constant 0 : i32
    %c0_i32_0 = arith.constant 0 : i32
    return %arg0, %c0_i32 : i32, i32
  }
  func.func @transform_4(%arg0: i32) -> (i32, i32) {
    %c0_i32 = arith.constant 0 : i32
    %c0_i32_0 = arith.constant 0 : i32
    return %arg0, %c0_i32 : i32, i32
  }
  func.func @transform_5(%arg0: i32) -> (i32, i32) {
    %c0_i32 = arith.constant 0 : i32
    %c0_i32_0 = arith.constant 0 : i32
    %c0_i32_1 = arith.constant 0 : i32
    return %c0_i32, %c0_i32_0 : i32, i32
  }
  func.func @transform_6(%arg0: i32) -> (i32, i32) {
    %c0_i32 = arith.constant 0 : i32
    %c0_i32_0 = arith.constant 0 : i32
    %c0_i32_1 = arith.constant 0 : i32
    return %c0_i32, %c0_i32_0 : i32, i32
  }
  func.func @transform_7(%arg0: i32) -> (i32, i32) {
    %c0_i32 = arith.constant 0 : i32
    %c0_i32_0 = arith.constant 0 : i32
    %c0_i32_1 = arith.constant 0 : i32
    return %c0_i32, %c0_i32_0 : i32, i32
  }
  func.func @transform_8(%arg0: i32) -> (i32, i32) {
    %c0_i32 = arith.constant 0 : i32
    %c0_i32_0 = arith.constant 0 : i32
    %c0_i32_1 = arith.constant 0 : i32
    return %c0_i32, %c0_i32_0 : i32, i32
  }
  func.func @transform_9(%arg0: i32) -> (i32, i32) {
    %c0_i32 = arith.constant 0 : i32
    %c0_i32_0 = arith.constant 0 : i32
    %c0_i32_1 = arith.constant 0 : i32
    return %c0_i32, %c0_i32_0 : i32, i32
  }
  func.func @transform_10(%arg0: i32) -> (i32, i32) {
    %c0_i32 = arith.constant 0 : i32
    %c0_i32_0 = arith.constant 0 : i32
    %c0_i32_1 = arith.constant 0 : i32
    return %c0_i32, %c0_i32_0 : i32, i32
  }
  func.func @transform_11(%arg0: i32) -> (i32, i32) {
    %c0_i32 = arith.constant 0 : i32
    %c0_i32_0 = arith.constant 0 : i32
    %c0_i32_1 = arith.constant 0 : i32
    return %c0_i32, %c0_i32_0 : i32, i32
  }
  func.func @transform_12(%arg0: i32) -> (i32, i32) {
    %c0_i32 = arith.constant 0 : i32
    %c0_i32_0 = arith.constant 0 : i32
    %c0_i32_1 = arith.constant 0 : i32
    return %c0_i32, %c0_i32_0 : i32, i32
  }
  func.func @transform_13(%arg0: i32) -> (i32, i32) {
    %c0_i32 = arith.constant 0 : i32
    %c0_i32_0 = arith.constant 0 : i32
    %c0_i32_1 = arith.constant 0 : i32
    return %c0_i32, %c0_i32_0 : i32, i32
  }
  func.func @transform_14(%arg0: i32) -> (i32, i32) {
    %c0_i32 = arith.constant 0 : i32
    %c0_i32_0 = arith.constant 0 : i32
    %c0_i32_1 = arith.constant 0 : i32
    return %c0_i32, %c0_i32_0 : i32, i32
  }
  func.func @transform_15(%arg0: i32) -> (i32, i32) {
    %c0_i32 = arith.constant 0 : i32
    %c0_i32_0 = arith.constant 0 : i32
    %c0_i32_1 = arith.constant 0 : i32
    return %c0_i32, %c0_i32_0 : i32, i32
  }
  func.func @transform_16(%arg0: i32) -> (i32, i32, i32) {
    %c0_i32 = arith.constant 0 : i32
    %c0_i32_0 = arith.constant 0 : i32
    %c0_i32_1 = arith.constant 0 : i32
    return %arg0, %c0_i32, %c0_i32_0 : i32, i32, i32
  }
}

module attributes {stable_mosaic.version = 11 : i64} {
  func.func @_stats1_kernel(%arg0: i32, %arg1: memref<8x32xf32, #tpu.memory_space<vmem>>, %arg2: memref<8x32xf32, #tpu.memory_space<vmem>>, %arg3: memref<8x32xf32, #tpu.memory_space<vmem>>, %arg4: memref<8x32xf32, #tpu.memory_space<vmem>>, %arg5: memref<8x32xf32, #tpu.memory_space<vmem>>, %arg6: memref<32x128xf32, #tpu.memory_space<vmem>>, %arg7: memref<32x128xf32, #tpu.memory_space<vmem>>, %arg8: memref<1x128xf32, #tpu.memory_space<vmem>>, %arg9: memref<1x1x128xf32, #tpu.memory_space<vmem>>, %arg10: memref<1x1x128xf32, #tpu.memory_space<vmem>>) attributes {dimension_semantics = [#tpu.dimension_semantics<parallel>], iteration_bounds = array<i64: 1>, scalar_prefetch = 0 : i64, scratch_operands = 0 : i64, tpu.core_type = #tpu.core_type<tc>, window_params = [{transform_indices = @transform_0, window_bounds = array<i64: 8, 32>}, {transform_indices = @transform_1, window_bounds = array<i64: 8, 32>}, {transform_indices = @transform_2, window_bounds = array<i64: 8, 32>}, {transform_indices = @transform_3, window_bounds = array<i64: 8, 32>}, {transform_indices = @transform_4, window_bounds = array<i64: 8, 32>}, {pipeline_mode = #tpu.pipeline_mode<synchronous>, transform_indices = @transform_5, window_bounds = array<i64: 32, 128>}, {pipeline_mode = #tpu.pipeline_mode<synchronous>, transform_indices = @transform_6, window_bounds = array<i64: 32, 128>}, {pipeline_mode = #tpu.pipeline_mode<synchronous>, transform_indices = @transform_7, window_bounds = array<i64: 1, 128>}, {transform_indices = @transform_8, window_bounds = array<i64: 1, 1, 128>}, {transform_indices = @transform_9, window_bounds = array<i64: 1, 1, 128>}]} {
    %c0 = arith.constant 0 : index
    %c0_0 = arith.constant 0 : index
    %0 = vector.load %arg1[%c0, %c0_0] : memref<8x32xf32, #tpu.memory_space<vmem>>, vector<8x32xf32>
    %c0_1 = arith.constant 0 : index
    %c0_2 = arith.constant 0 : index
    %1 = vector.load %arg2[%c0_1, %c0_2] : memref<8x32xf32, #tpu.memory_space<vmem>>, vector<8x32xf32>
    %c0_3 = arith.constant 0 : index
    %c0_4 = arith.constant 0 : index
    %2 = vector.load %arg3[%c0_3, %c0_4] : memref<8x32xf32, #tpu.memory_space<vmem>>, vector<8x32xf32>
    %c0_5 = arith.constant 0 : index
    %c0_6 = arith.constant 0 : index
    %3 = vector.load %arg4[%c0_5, %c0_6] : memref<8x32xf32, #tpu.memory_space<vmem>>, vector<8x32xf32>
    %c0_7 = arith.constant 0 : index
    %c0_8 = arith.constant 0 : index
    %4 = vector.load %arg5[%c0_7, %c0_8] : memref<8x32xf32, #tpu.memory_space<vmem>>, vector<8x32xf32>
    %c0_9 = arith.constant 0 : index
    %c0_10 = arith.constant 0 : index
    %5 = vector.load %arg6[%c0_9, %c0_10] : memref<32x128xf32, #tpu.memory_space<vmem>>, vector<32x128xf32>
    %c0_11 = arith.constant 0 : index
    %c0_12 = arith.constant 0 : index
    %6 = vector.load %arg7[%c0_11, %c0_12] : memref<32x128xf32, #tpu.memory_space<vmem>>, vector<32x128xf32>
    %c0_13 = arith.constant 0 : index
    %c0_14 = arith.constant 0 : index
    %7 = vector.load %arg8[%c0_13, %c0_14] : memref<1x128xf32, #tpu.memory_space<vmem>>, vector<1x128xf32>
    %8 = arith.addf %0, %1 : vector<8x32xf32>
    %9 = arith.addf %2, %3 : vector<8x32xf32>
    %10 = arith.addf %9, %4 : vector<8x32xf32>
    %cst = arith.constant dense<0.000000e+00> : vector<8x128xf32>
    %11 = tpu.matmul %8, %5, %cst {dimension_numbers = #tpu.dot_dimension_numbers<[1], [0], [0], [1], [0, 0, 1, 1], [], []>} : vector<8x32xf32>, vector<32x128xf32>, vector<8x128xf32> -> vector<8x128xf32>
    %cst_15 = arith.constant dense<0.000000e+00> : vector<8x128xf32>
    %12 = tpu.matmul %10, %6, %cst_15 {dimension_numbers = #tpu.dot_dimension_numbers<[1], [0], [0], [1], [0, 0, 1, 1], [], []>} : vector<8x32xf32>, vector<32x128xf32>, vector<8x128xf32> -> vector<8x128xf32>
    %13 = arith.addf %11, %12 : vector<8x128xf32>
    %14 = vector.broadcast %7 : vector<1x128xf32> to vector<8x128xf32>
    %15 = arith.addf %13, %14 : vector<8x128xf32>
    %cst_16 = arith.constant 0.000000e+00 : f32
    %16 = vector.broadcast %cst_16 : f32 to vector<8x128xf32>
    %17 = arith.maximumf %15, %16 : vector<8x128xf32>
    %cst_17 = arith.constant dense<0.000000e+00> : vector<128xf32>
    %18 = vector.multi_reduction <add>, %17, %cst_17 [0] : vector<8x128xf32> to vector<128xf32>
    %19 = vector.shape_cast %18 : vector<128xf32> to vector<1x128xf32>
    %c0_18 = arith.constant 0 : index
    %c0_19 = arith.constant 0 : index
    %c0_20 = arith.constant 0 : index
    %20 = vector.load %arg9[%c0_18, %c0_19, %c0_20] : memref<1x1x128xf32, #tpu.memory_space<vmem>>, vector<1x1x128xf32>
    %21 = vector.shape_cast %20 : vector<1x1x128xf32> to vector<1x128xf32>
    %22 = vector.shape_cast %19 : vector<1x128xf32> to vector<1x1x128xf32>
    tpu.vector_store %arg9[%c0_18, %c0_19, %c0_20], %22 {strides = array<i32>} : memref<1x1x128xf32, #tpu.memory_space<vmem>>, vector<1x1x128xf32>,
    %23 = arith.mulf %17, %17 : vector<8x128xf32>
    %cst_21 = arith.constant dense<0.000000e+00> : vector<128xf32>
    %24 = vector.multi_reduction <add>, %23, %cst_21 [0] : vector<8x128xf32> to vector<128xf32>
    %25 = vector.shape_cast %24 : vector<128xf32> to vector<1x128xf32>
    %c0_22 = arith.constant 0 : index
    %c0_23 = arith.constant 0 : index
    %c0_24 = arith.constant 0 : index
    %26 = vector.load %arg10[%c0_22, %c0_23, %c0_24] : memref<1x1x128xf32, #tpu.memory_space<vmem>>, vector<1x1x128xf32>
    %27 = vector.shape_cast %26 : vector<1x1x128xf32> to vector<1x128xf32>
    %28 = vector.shape_cast %25 : vector<1x128xf32> to vector<1x1x128xf32>
    tpu.vector_store %arg10[%c0_22, %c0_23, %c0_24], %28 {strides = array<i32>} : memref<1x1x128xf32, #tpu.memory_space<vmem>>, vector<1x1x128xf32>,
    return
  }
  func.func @transform_0(%arg0: i32) -> (i32, i32) {
    %c0_i32 = arith.constant 0 : i32
    %c0_i32_0 = arith.constant 0 : i32
    return %arg0, %c0_i32 : i32, i32
  }
  func.func @transform_1(%arg0: i32) -> (i32, i32) {
    %c0_i32 = arith.constant 0 : i32
    %c0_i32_0 = arith.constant 0 : i32
    return %arg0, %c0_i32 : i32, i32
  }
  func.func @transform_2(%arg0: i32) -> (i32, i32) {
    %c0_i32 = arith.constant 0 : i32
    %c0_i32_0 = arith.constant 0 : i32
    return %arg0, %c0_i32 : i32, i32
  }
  func.func @transform_3(%arg0: i32) -> (i32, i32) {
    %c0_i32 = arith.constant 0 : i32
    %c0_i32_0 = arith.constant 0 : i32
    return %arg0, %c0_i32 : i32, i32
  }
  func.func @transform_4(%arg0: i32) -> (i32, i32) {
    %c0_i32 = arith.constant 0 : i32
    %c0_i32_0 = arith.constant 0 : i32
    return %arg0, %c0_i32 : i32, i32
  }
  func.func @transform_5(%arg0: i32) -> (i32, i32) {
    %c0_i32 = arith.constant 0 : i32
    %c0_i32_0 = arith.constant 0 : i32
    %c0_i32_1 = arith.constant 0 : i32
    return %c0_i32, %c0_i32_0 : i32, i32
  }
  func.func @transform_6(%arg0: i32) -> (i32, i32) {
    %c0_i32 = arith.constant 0 : i32
    %c0_i32_0 = arith.constant 0 : i32
    %c0_i32_1 = arith.constant 0 : i32
    return %c0_i32, %c0_i32_0 : i32, i32
  }
  func.func @transform_7(%arg0: i32) -> (i32, i32) {
    %c0_i32 = arith.constant 0 : i32
    %c0_i32_0 = arith.constant 0 : i32
    %c0_i32_1 = arith.constant 0 : i32
    return %c0_i32, %c0_i32_0 : i32, i32
  }
  func.func @transform_8(%arg0: i32) -> (i32, i32, i32) {
    %c0_i32 = arith.constant 0 : i32
    %c0_i32_0 = arith.constant 0 : i32
    %c0_i32_1 = arith.constant 0 : i32
    return %arg0, %c0_i32, %c0_i32_0 : i32, i32, i32
  }
  func.func @transform_9(%arg0: i32) -> (i32, i32, i32) {
    %c0_i32 = arith.constant 0 : i32
    %c0_i32_0 = arith.constant 0 : i32
    %c0_i32_1 = arith.constant 0 : i32
    return %arg0, %c0_i32, %c0_i32_0 : i32, i32, i32
  }
}

</mosaic_0001>

<llo_original>
// kernel: fused_prompt_mlp.4
$region0: #{fused_prompt_mlp.4}
  #allocation0 [shape = 'u32[]', space=smem, size = 0x4, offset = 0x4, fixed_abs, tag = 'smem constant byte address 0x4 - core index']
  #allocation1 [shape = 'u32[144,128]{1,0:T(1,128)}', space=vmem, size = 0x12000, scoped, tag = 'internal scratch']
  %s0 = inlined_call_operand.vmem [shape: f32[8,32], index: 0, kind: input, shape index: {}]
  %s1 = inlined_call_operand.vmem [shape: f32[8,32], index: 1, kind: input, shape index: {}]
  %s2 = inlined_call_operand.vmem [shape: f32[8,32], index: 2, kind: input, shape index: {}]
  %s3 = inlined_call_operand.vmem [shape: f32[8,32], index: 3, kind: input, shape index: {}]
  %s4 = inlined_call_operand.vmem [shape: f32[8,32], index: 4, kind: input, shape index: {}]
  %s5 = inlined_call_operand.vmem [shape: f32[32,128], index: 5, kind: input, shape index: {}]
  %s6 = inlined_call_operand.vmem [shape: f32[32,128], index: 6, kind: input, shape index: {}]
  %s7 = inlined_call_operand.vmem [shape: f32[1,128], index: 7, kind: input, shape index: {}]
  %s8 = inlined_call_operand.vmem [shape: f32[1,128], index: 8, kind: input, shape index: {}]
  %s9 = inlined_call_operand.vmem [shape: f32[1,128], index: 9, kind: input, shape index: {}]
  %s10 = inlined_call_operand.hbm [shape: f32[128,128], index: 10, kind: input, shape index: {}]
  %s11 = inlined_call_operand.vmem [shape: f32[1,128], index: 11, kind: input, shape index: {}]
  %s12 = inlined_call_operand.vmem [shape: f32[1,1,128], index: 12, kind: output, shape index: {0}]
  %s13 = inlined_call_operand.vmem [shape: f32[1,1,128], index: 13, kind: output, shape index: {1}]
  %14 = xla_tuple %s12, %s13
  %s15 = sld [smem:[#allocation0]]
  $region70: #{fused_prompt_mlp.4} parent=0
    _
  %s17 = ssub.s32 1, %s15
  %s18 = scalar_select 0, %s17, %s15
  $region1: #{fused_prompt_mlp.4} parent=0
    #allocation2 [shape = 'u8[65536]{0}', space=vmem, size = 0x10000, scoped, tag = 'input window, operand 10, single buffered']
    #allocation3 [shape = 's32[1]{0}', space=sflag, size = 0x4, scoped, tag = 'scoped memory for fused_prompt_mlp.4']
    %19 = vsyncpa [#allocation3], 0
    // Predicated region
    $region2: #{fused_prompt_mlp.4} parent=1 // pred_check
      _
    $region3: #{fused_prompt_mlp.4} parent=1 // pred_check_branch
      %21 = sbr.rel (0) target = $region5
    $region4: #{fused_prompt_mlp.4} parent=1 // pred_region
      _
    $region5: #{fused_prompt_mlp.4} parent=1 // pred_fallthru
      _
    // Predicated region
    $region6: #{fused_prompt_mlp.4} parent=1 // pred_check
      _
    $region7: #{fused_prompt_mlp.4} parent=1 // pred_check_branch
      %23 = sbr.rel (0) target = $region9
    $region8: #{fused_prompt_mlp.4} parent=1 // pred_region
      _
    $region9: #{fused_prompt_mlp.4} parent=1 // pred_fallthru
      _
    // Predicated region
    $region10: #{fused_prompt_mlp.4} parent=1 // pred_check
      _
    $region11: #{fused_prompt_mlp.4} parent=1 // pred_check_branch
      %25 = sbr.rel (0) target = $region13
    $region12: #{fused_prompt_mlp.4} parent=1 // pred_region
      _
    $region13: #{fused_prompt_mlp.4} parent=1 // pred_fallthru
      _
    // Predicated region
    $region14: #{fused_prompt_mlp.4} parent=1 // pred_check
      _
    $region15: #{fused_prompt_mlp.4} parent=1 // pred_check_branch
      %27 = sbr.rel (0) target = $region17
    $region16: #{fused_prompt_mlp.4} parent=1 // pred_region
      _
    $region17: #{fused_prompt_mlp.4} parent=1 // pred_fallthru
      _
    // Predicated region
    $region18: #{fused_prompt_mlp.4} parent=1 // pred_check
      _
    $region19: #{fused_prompt_mlp.4} parent=1 // pred_check_branch
      %29 = sbr.rel (0) target = $region21
    $region20: #{fused_prompt_mlp.4} parent=1 // pred_region
      _
    $region21: #{fused_prompt_mlp.4} parent=1 // pred_fallthru
      _
    // Predicated region
    $region22: #{fused_prompt_mlp.4} parent=1 // pred_check
      _
    $region23: #{fused_prompt_mlp.4} parent=1 // pred_check_branch
      %31 = sbr.rel (0) target = $region25
    $region24: #{fused_prompt_mlp.4} parent=1 // pred_region
      _
    $region25: #{fused_prompt_mlp.4} parent=1 // pred_fallthru
      _
    // Predicated region
    $region26: #{fused_prompt_mlp.4} parent=1 // pred_check
      _
    $region27: #{fused_prompt_mlp.4} parent=1 // pred_check_branch
      %33 = sbr.rel (0) target = $region29
    $region28: #{fused_prompt_mlp.4} parent=1 // pred_region
      _
    $region29: #{fused_prompt_mlp.4} parent=1 // pred_fallthru
      _
    // Predicated region
    $region30: #{fused_prompt_mlp.4} parent=1 // pred_check
      _
    $region31: #{fused_prompt_mlp.4} parent=1 // pred_check_branch
      %35 = sbr.rel (0) target = $region33
    $region32: #{fused_prompt_mlp.4} parent=1 // pred_region
      _
    $region33: #{fused_prompt_mlp.4} parent=1 // pred_fallthru
      _
    // Predicated region
    $region34: #{fused_prompt_mlp.4} parent=1 // pred_check
      _
    $region35: #{fused_prompt_mlp.4} parent=1 // pred_check_branch
      %37 = sbr.rel (0) target = $region37
    $region36: #{fused_prompt_mlp.4} parent=1 // pred_region
      _
    $region37: #{fused_prompt_mlp.4} parent=1 // pred_fallthru
      _
    // Predicated region
    $region38: #{fused_prompt_mlp.4} parent=1 // pred_check
      _
    $region39: #{fused_prompt_mlp.4} parent=1 // pred_check_branch
      %39 = sbr.rel (0) target = $region41
    $region40: #{fused_prompt_mlp.4} parent=1 // pred_region
      _
    $region41: #{fused_prompt_mlp.4} parent=1 // pred_fallthru
      _
    // Predicated region
    $region42: #{fused_prompt_mlp.4} parent=1 // pred_check
      _
    $region43: #{fused_prompt_mlp.4} parent=1 // pred_check_branch
      %41 = sbr.rel (0) target = $region45
    $region44: #{fused_prompt_mlp.4} parent=1 // pred_region
      %s43 = ssub.s32 2048, 2048
      %44 = vsyncadd [#allocation3], %s43
      %s45 = sshll.u32 [#allocation2], 4
      %s46 = int_to_ptr.vmem [resolvable:$true] %s45
      %51 = dma.hbm_to_vmem [thread:$0]  %s10, 2048, %s46, [#allocation3], 128, 128, 8
    $region45: #{fused_prompt_mlp.4} parent=1 // pred_fallthru
      _
    // Predicated region
    $region46: #{fused_prompt_mlp.4} parent=1 // pred_check
      _
    $region47: #{fused_prompt_mlp.4} parent=1 // pred_check_branch
      %53 = sbr.rel (0) target = $region49
    $region48: #{fused_prompt_mlp.4} parent=1 // pred_region
      _
    $region49: #{fused_prompt_mlp.4} parent=1 // pred_fallthru
      _
    // Predicated region
    $region50: #{fused_prompt_mlp.4} parent=1 // pred_check
      _
    $region51: #{fused_prompt_mlp.4} parent=1 // pred_check_branch
      %55 = sbr.rel (0) target = $region53
    $region52: #{fused_prompt_mlp.4} parent=1 // pred_region
      %56 = dma.done [#allocation3], 2048
    $region53: #{fused_prompt_mlp.4} parent=1 // pred_fallthru
      _
    %v57 = vld [vmem:[%s0] sm:$0xff]
    %v58 = vld [vmem:[%s1] sm:$0xff]
    %v59 = vld [vmem:[%s2] sm:$0xff]
    %v60 = vld [vmem:[%s3] sm:$0xff]
    %v61 = vld [vmem:[%s4] sm:$0xff]
    %v62 = vld [vmem:[%s5] sm:$0xff]
    %v63 = vld [vmem:[%s5 + $0x8] sm:$0xff]
    %v64 = vld [vmem:[%s5 + $0x10] sm:$0xff]
    %v65 = vld [vmem:[%s5 + $0x18] sm:$0xff]
    %v66 = vld [vmem:[%s6] sm:$0xff]
    %v67 = vld [vmem:[%s6 + $0x8] sm:$0xff]
    %v68 = vld [vmem:[%s6 + $0x10] sm:$0xff]
    %v69 = vld [vmem:[%s6 + $0x18] sm:$0xff]
    %v70 = vld [vmem:[%s7] sm:$0x1]
    %v71 = vadd.f32 %v57, %v58
    %v72 = vadd.f32 %v59, %v60
    %v73 = vadd.f32 %v72, %v61
    %vm74 = vcmask 261120
    %v76 = vsel %vm74, %v73, 0
    %78 = vmatprep.subr.mxu0 0.0
    %79 = vmatpush1.msra.mxu0 0.0
    %80 = vmatprep.subr.mxu0 0.0
    %81 = vmatpush1.msra.mxu0 0.0
    %82 = vmatprep.subr.mxu0 0.0
    %83 = vmatpush1.msra.mxu0 0.0
    %84 = vmatprep.subr.mxu0 0.0
    %85 = vmatpush1.msra.mxu0 0.0
    %86 = vmatprep.subr.mxu0 0.0
    %87 = vmatpush1.msra.mxu0 0.0
    %88 = vmatprep.subr.mxu0 0.0
    %89 = vmatpush1.msra.mxu0 0.0
    %90 = vmatprep.subr.mxu0 0.0
    %91 = vmatpush1.msra.mxu0 0.0
    %92 = vmatprep.subr.mxu0 0.0
    %93 = vmatpush1.msra.mxu0 0.0
    %94 = vmatprep.subr.mxu0 0.0
    %95 = vmatpush1.msra.mxu0 0.0
    %96 = vmatprep.subr.mxu0 0.0
    %97 = vmatpush1.msra.mxu0 0.0
    %98 = vmatprep.subr.mxu0 0.0
    %99 = vmatpush1.msra.mxu0 0.0
    %100 = vmatprep.subr.mxu0 0.0
    %101 = vmatpush1.msra.mxu0 0.0
    %102 = vmatprep.subr.mxu0 0.0
    %103 = vmatpush1.msra.mxu0 %v69
    %104 = vmatprep.subr.mxu0 0.0
    %105 = vmatpush1.msra.mxu0 %v68
    %106 = vmatprep.subr.mxu0 0.0
    %107 = vmatpush1.msra.mxu0 %v67
    %108 = vmatprep.subr.mxu0 0.0
    %109 = vmatpush1.msra.mxu0 %v66
    %110 = vmatprep.subr.mxu0 0.0
    %111 = vmatpush2.msra.mxu0 0.0
    %112 = vmatprep.subr.mxu0 0.0
    %113 = vmatpush2.msra.mxu0 0.0
    %114 = vmatprep.subr.mxu0 0.0
    %115 = vmatpush2.msra.mxu0 0.0
    %116 = vmatprep.subr.mxu0 0.0
    %117 = vmatpush2.msra.mxu0 0.0
    %118 = vmatprep.subr.mxu0 0.0
    %119 = vmatpush2.msra.mxu0 0.0
    %120 = vmatprep.subr.mxu0 0.0
    %121 = vmatpush2.msra.mxu0 0.0
    %122 = vmatprep.subr.mxu0 0.0
    %123 = vmatpush2.msra.mxu0 0.0
    %124 = vmatprep.subr.mxu0 0.0
    %125 = vmatpush2.msra.mxu0 0.0
    %126 = vmatprep.subr.mxu0 0.0
    %127 = vmatpush2.msra.mxu0 0.0
    %128 = vmatprep.subr.mxu0 0.0
    %129 = vmatpush2.msra.mxu0 0.0
    %130 = vmatprep.subr.mxu0 0.0
    %131 = vmatpush2.msra.mxu0 0.0
    %132 = vmatprep.subr.mxu0 0.0
    %133 = vmatpush2.msra.mxu0 0.0
    %134 = vmatprep.subr.mxu0 0.0
    %135 = vmatpush2.msra.mxu0 0.0
    %136 = vmatprep.subr.mxu0 0.0
    %137 = vmatpush2.msra.mxu0 0.0
    %138 = vmatprep.subr.mxu0 0.0
    %139 = vmatpush2.msra.mxu0 0.0
    %140 = vmatprep.subr.mxu0 0.0
    %141 = vmatpush2.msra.mxu0 0.0
    %142 = vmatprep.mubr.f32.mxu0 0.0
    %143 = vmatmul.mubr.f32.gmra.mxu0 %v76
    %v144 = vpop.f32.mrf.mxu0
    %v145 = vadd.f32 0.0, %v144
    %v146 = vpop.f32.mrf.mxu0
    %147 = vdwg.mxu0
    %v149 = vsel %vm74, %v71, 0
    %151 = vmatprep.subr.mxu0 0.0
    %152 = vmatpush1.msra.mxu0 0.0
    %153 = vmatprep.subr.mxu0 0.0
    %154 = vmatpush1.msra.mxu0 0.0
    %155 = vmatprep.subr.mxu0 0.0
    %156 = vmatpush1.msra.mxu0 0.0
    %157 = vmatprep.subr.mxu0 0.0
    %158 = vmatpush1.msra.mxu0 0.0
    %159 = vmatprep.subr.mxu0 0.0
    %160 = vmatpush1.msra.mxu0 0.0
    %161 = vmatprep.subr.mxu0 0.0
    %162 = vmatpush1.msra.mxu0 0.0
    %163 = vmatprep.subr.mxu0 0.0
    %164 = vmatpush1.msra.mxu0 0.0
    %165 = vmatprep.subr.mxu0 0.0
    %166 = vmatpush1.msra.mxu0 0.0
    %167 = vmatprep.subr.mxu0 0.0
    %168 = vmatpush1.msra.mxu0 0.0
    %169 = vmatprep.subr.mxu0 0.0
    %170 = vmatpush1.msra.mxu0 0.0
    %171 = vmatprep.subr.mxu0 0.0
    %172 = vmatpush1.msra.mxu0 0.0
    %173 = vmatprep.subr.mxu0 0.0
    %174 = vmatpush1.msra.mxu0 0.0
    %175 = vmatprep.subr.mxu0 0.0
    %176 = vmatpush1.msra.mxu0 %v65
    %177 = vmatprep.subr.mxu0 0.0
    %178 = vmatpush1.msra.mxu0 %v64
    %179 = vmatprep.subr.mxu0 0.0
    %180 = vmatpush1.msra.mxu0 %v63
    %181 = vmatprep.subr.mxu0 0.0
    %182 = vmatpush1.msra.mxu0 %v62
    %183 = vmatprep.subr.mxu0 0.0
    %184 = vmatpush2.msra.mxu0 0.0
    %185 = vmatprep.subr.mxu0 0.0
    %186 = vmatpush2.msra.mxu0 0.0
    %187 = vmatprep.subr.mxu0 0.0
    %188 = vmatpush2.msra.mxu0 0.0
    %189 = vmatprep.subr.mxu0 0.0
    %190 = vmatpush2.msra.mxu0 0.0
    %191 = vmatprep.subr.mxu0 0.0
    %192 = vmatpush2.msra.mxu0 0.0
    %193 = vmatprep.subr.mxu0 0.0
    %194 = vmatpush2.msra.mxu0 0.0
    %195 = vmatprep.subr.mxu0 0.0
    %196 = vmatpush2.msra.mxu0 0.0
    %197 = vmatprep.subr.mxu0 0.0
    %198 = vmatpush2.msra.mxu0 0.0
    %199 = vmatprep.subr.mxu0 0.0
    %200 = vmatpush2.msra.mxu0 0.0
    %201 = vmatprep.subr.mxu0 0.0
    %202 = vmatpush2.msra.mxu0 0.0
    %203 = vmatprep.subr.mxu0 0.0
    %204 = vmatpush2.msra.mxu0 0.0
    %205 = vmatprep.subr.mxu0 0.0
    %206 = vmatpush2.msra.mxu0 0.0
    %207 = vmatprep.subr.mxu0 0.0
    %208 = vmatpush2.msra.mxu0 0.0
    %209 = vmatprep.subr.mxu0 0.0
    %210 = vmatpush2.msra.mxu0 0.0
    %211 = vmatprep.subr.mxu0 0.0
    %212 = vmatpush2.msra.mxu0 0.0
    %213 = vmatprep.subr.mxu0 0.0
    %214 = vmatpush2.msra.mxu0 0.0
    %215 = vmatprep.mubr.f32.mxu0 0.0
    %216 = vmatmul.mubr.f32.gmra.mxu0 %v149
    %v217 = vpop.f32.mrf.mxu0
    %v218 = vadd.f32 %v145, %v217
    %v219 = vpop.f32.mrf.mxu0
    %220 = vdwg.mxu0
    %v222 = vlaneseq
    %v223 = vshrl.u32 %v222, 7
    %v224 = vsub.s32 0, %v223
    %v225 = vrot.slane %v70, %v224
    %v227 = vadd.f32 %v218, %v225
    %v228 = vmax.f32 %v227, 0.0
    %v229 = vld [vmem:[%s8] sm:$0x1]
    %v231 = vlaneseq
    %v232 = vshrl.u32 %v231, 7
    %v233 = vsub.s32 0, %v232
    %v234 = vrot.slane %v229, %v233
    %v236 = vmul.f32 %v228, %v234
    %v237 = vld [vmem:[%s9] sm:$0x1]
    %v239 = vlaneseq
    %v240 = vshrl.u32 %v239, 7
    %v241 = vsub.s32 0, %v240
    %v242 = vrot.slane %v237, %v241
    %v244 = vadd.f32 %v236, %v242
    %v245 = vld [vmem:[#allocation2] sm:$0xff]
    %v246 = vld [vmem:[#allocation2 + $0x8] sm:$0xff]
    %v247 = vld [vmem:[#allocation2 + $0x10] sm:$0xff]
    %v248 = vld [vmem:[#allocation2 + $0x18] sm:$0xff]
    %v249 = vld [vmem:[#allocation2 + $0x20] sm:$0xff]
    %v250 = vld [vmem:[#allocation2 + $0x28] sm:$0xff]
    %v251 = vld [vmem:[#allocation2 + $0x30] sm:$0xff]
    %v252 = vld [vmem:[#allocation2 + $0x38] sm:$0xff]
    %v253 = vld [vmem:[#allocation2 + $0x40] sm:$0xff]
    %v254 = vld [vmem:[#allocation2 + $0x48] sm:$0xff]
    %v255 = vld [vmem:[#allocation2 + $0x50] sm:$0xff]
    %v256 = vld [vmem:[#allocation2 + $0x58] sm:$0xff]
    %v257 = vld [vmem:[#allocation2 + $0x60] sm:$0xff]
    %v258 = vld [vmem:[#allocation2 + $0x68] sm:$0xff]
    %v259 = vld [vmem:[#allocation2 + $0x70] sm:$0xff]
    %v260 = vld [vmem:[#allocation2 + $0x78] sm:$0xff]
    %v261 = vld [vmem:[%s11] sm:$0x1]
    %v263 = vlaneseq
    %v264 = vshrl.u32 %v263, 7
    %v265 = vsub.s32 0, %v264
    %v266 = vrot.slane %v261, %v265
    %268 = vmatprep.subr.mxu0 0.0
    %269 = vmatpush1.msra.mxu0 %v260
    %270 = vmatprep.subr.mxu0 0.0
    %271 = vmatpush1.msra.mxu0 %v259
    %272 = vmatprep.subr.mxu0 0.0
    %273 = vmatpush1.msra.mxu0 %v258
    %274 = vmatprep.subr.mxu0 0.0
    %275 = vmatpush1.msra.mxu0 %v257
    %276 = vmatprep.subr.mxu0 0.0
    %277 = vmatpush1.msra.mxu0 %v256
    %278 = vmatprep.subr.mxu0 0.0
    %279 = vmatpush1.msra.mxu0 %v255
    %280 = vmatprep.subr.mxu0 0.0
    %281 = vmatpush1.msra.mxu0 %v254
    %282 = vmatprep.subr.mxu0 0.0
    %283 = vmatpush1.msra.mxu0 %v253
    %284 = vmatprep.subr.mxu0 0.0
    %285 = vmatpush1.msra.mxu0 %v252
    %286 = vmatprep.subr.mxu0 0.0
    %287 = vmatpush1.msra.mxu0 %v251
    %288 = vmatprep.subr.mxu0 0.0
    %289 = vmatpush1.msra.mxu0 %v250
    %290 = vmatprep.subr.mxu0 0.0
    %291 = vmatpush1.msra.mxu0 %v249
    %292 = vmatprep.subr.mxu0 0.0
    %293 = vmatpush1.msra.mxu0 %v248
    %294 = vmatprep.subr.mxu0 0.0
    %295 = vmatpush1.msra.mxu0 %v247
    %296 = vmatprep.subr.mxu0 0.0
    %297 = vmatpush1.msra.mxu0 %v246
    %298 = vmatprep.subr.mxu0 0.0
    %299 = vmatpush1.msra.mxu0 %v245
    %300 = vmatprep.subr.mxu0 0.0
    %301 = vmatpush2.msra.mxu0 0.0
    %302 = vmatprep.subr.mxu0 0.0
    %303 = vmatpush2.msra.mxu0 0.0
    %304 = vmatprep.subr.mxu0 0.0
    %305 = vmatpush2.msra.mxu0 0.0
    %306 = vmatprep.subr.mxu0 0.0
    %307 = vmatpush2.msra.mxu0 0.0
    %308 = vmatprep.subr.mxu0 0.0
    %309 = vmatpush2.msra.mxu0 0.0
    %310 = vmatprep.subr.mxu0 0.0
    %311 = vmatpush2.msra.mxu0 0.0
    %312 = vmatprep.subr.mxu0 0.0
    %313 = vmatpush2.msra.mxu0 0.0
    %314 = vmatprep.subr.mxu0 0.0
    %315 = vmatpush2.msra.mxu0 0.0
    %316 = vmatprep.subr.mxu0 0.0
    %317 = vmatpush2.msra.mxu0 0.0
    %318 = vmatprep.subr.mxu0 0.0
    %319 = vmatpush2.msra.mxu0 0.0
    %320 = vmatprep.subr.mxu0 0.0
    %321 = vmatpush2.msra.mxu0 0.0
    %322 = vmatprep.subr.mxu0 0.0
    %323 = vmatpush2.msra.mxu0 0.0
    %324 = vmatprep.subr.mxu0 0.0
    %325 = vmatpush2.msra.mxu0 0.0
    %326 = vmatprep.subr.mxu0 0.0
    %327 = vmatpush2.msra.mxu0 0.0
    %328 = vmatprep.subr.mxu0 0.0
    %329 = vmatpush2.msra.mxu0 0.0
    %330 = vmatprep.subr.mxu0 0.0
    %331 = vmatpush2.msra.mxu0 0.0
    %332 = vmatprep.mubr.f32.mxu0 0.0
    %333 = vmatmul.mubr.f32.gmra.mxu0 %v244
    %v334 = vpop.f32.mrf.mxu0
    %v335 = vadd.f32 %v266, %v334
    %v336 = vpop.f32.mrf.mxu0
    %337 = vdwg.mxu0
    %v338 = vmax.f32 %v335, 0.0
    %v339 = vrot.slane %v338, 4
    %v340 = vadd.f32 %v338, %v339
    %v341 = vrot.slane %v340, 2
    %v342 = vadd.f32 %v340, %v341
    %v343 = vrot.slane %v342, 1
    %v344 = vadd.f32 %v342, %v343
    %345 = vst [vmem:[%s12] sm:$0x1] %v344
    %v346 = vmul.f32 %v338, %v338
    %v347 = vrot.slane %v346, 4
    %v348 = vadd.f32 %v346, %v347
    %v349 = vrot.slane %v348, 2
    %v350 = vadd.f32 %v348, %v349
    %v351 = vrot.slane %v350, 1
    %v352 = vadd.f32 %v350, %v351
    %353 = vst [vmem:[%s13] sm:$0x1] %v352
    // Predicated region
    $region54: #{fused_prompt_mlp.4} parent=1 // pred_check
      _
    $region55: #{fused_prompt_mlp.4} parent=1 // pred_check_branch
      %355 = sbr.rel (0) target = $region57
    $region56: #{fused_prompt_mlp.4} parent=1 // pred_region
      _
    $region57: #{fused_prompt_mlp.4} parent=1 // pred_fallthru
      _
    // Predicated region
    $region58: #{fused_prompt_mlp.4} parent=1 // pred_check
      _
    $region59: #{fused_prompt_mlp.4} parent=1 // pred_check_branch
      %357 = sbr.rel (0) target = $region61
    $region60: #{fused_prompt_mlp.4} parent=1 // pred_region
      _
    $region61: #{fused_prompt_mlp.4} parent=1 // pred_fallthru
      _
    // Predicated region
    $region62: #{fused_prompt_mlp.4} parent=1 // pred_check
      _
    $region63: #{fused_prompt_mlp.4} parent=1 // pred_check_branch
      %359 = sbr.rel (0) target = $region65
    $region64: #{fused_prompt_mlp.4} parent=1 // pred_region
      _
    $region65: #{fused_prompt_mlp.4} parent=1 // pred_fallthru
      _
    // Predicated region
    $region66: #{fused_prompt_mlp.4} parent=1 // pred_check
      _
    $region67: #{fused_prompt_mlp.4} parent=1 // pred_check_branch
      %361 = sbr.rel (0) target = $region69
    $region68: #{fused_prompt_mlp.4} parent=1 // pred_region
      _
    $region69: #{fused_prompt_mlp.4} parent=1 // pred_fallthru
      _
    %362 = vsyncpa [#allocation3], 1

// kernel: fused_prompt_mlp.5
$region0: #{fused_prompt_mlp.5}
  #allocation0 [shape = 'u32[]', space=smem, size = 0x4, offset = 0x4, fixed_abs, tag = 'smem constant byte address 0x4 - core index']
  #allocation1 [shape = 'u32[144,128]{1,0:T(1,128)}', space=vmem, size = 0x12000, scoped, tag = 'internal scratch']
  #allocation2 [shape = 'f32[1,1]{1,0:T(1,128)S(6)}', space=smem, size = 0x200, scoped, tag = 'scoped memory for fused_prompt_mlp.5']
  %s0 = inlined_call_operand.vmem [shape: f32[8,32], index: 0, kind: input, shape index: {}]
  %s1 = inlined_call_operand.vmem [shape: f32[8,32], index: 1, kind: input, shape index: {}]
  %s2 = inlined_call_operand.vmem [shape: f32[8,32], index: 2, kind: input, shape index: {}]
  %s3 = inlined_call_operand.vmem [shape: f32[8,32], index: 3, kind: input, shape index: {}]
  %s4 = inlined_call_operand.vmem [shape: f32[8,32], index: 4, kind: input, shape index: {}]
  %s5 = inlined_call_operand.vmem [shape: f32[32,128], index: 5, kind: input, shape index: {}]
  %s6 = inlined_call_operand.vmem [shape: f32[32,128], index: 6, kind: input, shape index: {}]
  %s7 = inlined_call_operand.vmem [shape: f32[1,128], index: 7, kind: input, shape index: {}]
  %s8 = inlined_call_operand.vmem [shape: f32[1,128], index: 8, kind: input, shape index: {}]
  %s9 = inlined_call_operand.vmem [shape: f32[1,128], index: 9, kind: input, shape index: {}]
  %s10 = inlined_call_operand.vmem [shape: f32[128,128], index: 10, kind: input, shape index: {}]
  %s11 = inlined_call_operand.vmem [shape: f32[1,128], index: 11, kind: input, shape index: {}]
  %s12 = inlined_call_operand.vmem [shape: f32[1,128], index: 12, kind: input, shape index: {}]
  %s13 = inlined_call_operand.vmem [shape: f32[1,128], index: 13, kind: input, shape index: {}]
  %s14 = inlined_call_operand.vmem [shape: f32[1,128], index: 14, kind: input, shape index: {}]
  %s15 = inlined_call_operand.<no memory space> [shape: f32[1,1], index: 15, kind: input, shape index: {}]
  %s16 = inlined_call_operand.hbm [shape: f32[1,1,8], index: 16, kind: output, shape index: {}]
  %s17 = sld [smem:[#allocation0]]
  $region74: #{fused_prompt_mlp.5} parent=0
    _
  %s19 = ssub.s32 1, %s17
  %s20 = scalar_select 0, %s19, %s17
  %21 = sst [smem:[#allocation2]] %s15
  $region1: #{fused_prompt_mlp.5} parent=0
    #allocation3 [shape = 'u8[512]{0}', space=vmem, size = 0x400, scoped, tag = 'output window, operand 0, single buffered']
    #allocation4 [shape = 's32[1]{0}', space=sflag, size = 0x4, scoped, tag = 'scoped memory for fused_prompt_mlp.5']
    %22 = vsyncpa [#allocation4], 0
    // Predicated region
    $region2: #{fused_prompt_mlp.5} parent=1 // pred_check
      _
    $region3: #{fused_prompt_mlp.5} parent=1 // pred_check_branch
      %24 = sbr.rel (0) target = $region5
    $region4: #{fused_prompt_mlp.5} parent=1 // pred_region
      _
    $region5: #{fused_prompt_mlp.5} parent=1 // pred_fallthru
      _
    // Predicated region
    $region6: #{fused_prompt_mlp.5} parent=1 // pred_check
      _
    $region7: #{fused_prompt_mlp.5} parent=1 // pred_check_branch
      %26 = sbr.rel (0) target = $region9
    $region8: #{fused_prompt_mlp.5} parent=1 // pred_region
      _
    $region9: #{fused_prompt_mlp.5} parent=1 // pred_fallthru
      _
    // Predicated region
    $region10: #{fused_prompt_mlp.5} parent=1 // pred_check
      _
    $region11: #{fused_prompt_mlp.5} parent=1 // pred_check_branch
      %28 = sbr.rel (0) target = $region13
    $region12: #{fused_prompt_mlp.5} parent=1 // pred_region
      _
    $region13: #{fused_prompt_mlp.5} parent=1 // pred_fallthru
      _
    // Predicated region
    $region14: #{fused_prompt_mlp.5} parent=1 // pred_check
      _
    $region15: #{fused_prompt_mlp.5} parent=1 // pred_check_branch
      %30 = sbr.rel (0) target = $region17
    $region16: #{fused_prompt_mlp.5} parent=1 // pred_region
      _
    $region17: #{fused_prompt_mlp.5} parent=1 // pred_fallthru
      _
    // Predicated region
    $region18: #{fused_prompt_mlp.5} parent=1 // pred_check
      _
    $region19: #{fused_prompt_mlp.5} parent=1 // pred_check_branch
      %32 = sbr.rel (0) target = $region21
    $region20: #{fused_prompt_mlp.5} parent=1 // pred_region
      _
    $region21: #{fused_prompt_mlp.5} parent=1 // pred_fallthru
      _
    // Predicated region
    $region22: #{fused_prompt_mlp.5} parent=1 // pred_check
      _
    $region23: #{fused_prompt_mlp.5} parent=1 // pred_check_branch
      %34 = sbr.rel (0) target = $region25
    $region24: #{fused_prompt_mlp.5} parent=1 // pred_region
      _
    $region25: #{fused_prompt_mlp.5} parent=1 // pred_fallthru
      _
    // Predicated region
    $region26: #{fused_prompt_mlp.5} parent=1 // pred_check
      _
    $region27: #{fused_prompt_mlp.5} parent=1 // pred_check_branch
      %36 = sbr.rel (0) target = $region29
    $region28: #{fused_prompt_mlp.5} parent=1 // pred_region
      _
    $region29: #{fused_prompt_mlp.5} parent=1 // pred_fallthru
      _
    // Predicated region
    $region30: #{fused_prompt_mlp.5} parent=1 // pred_check
      _
    $region31: #{fused_prompt_mlp.5} parent=1 // pred_check_branch
      %38 = sbr.rel (0) target = $region33
    $region32: #{fused_prompt_mlp.5} parent=1 // pred_region
      _
    $region33: #{fused_prompt_mlp.5} parent=1 // pred_fallthru
      _
    // Predicated region
    $region34: #{fused_prompt_mlp.5} parent=1 // pred_check
      _
    $region35: #{fused_prompt_mlp.5} parent=1 // pred_check_branch
      %40 = sbr.rel (0) target = $region37
    $region36: #{fused_prompt_mlp.5} parent=1 // pred_region
      _
    $region37: #{fused_prompt_mlp.5} parent=1 // pred_fallthru
      _
    // Predicated region
    $region38: #{fused_prompt_mlp.5} parent=1 // pred_check
      _
    $region39: #{fused_prompt_mlp.5} parent=1 // pred_check_branch
      %42 = sbr.rel (0) target = $region41
    $region40: #{fused_prompt_mlp.5} parent=1 // pred_region
      _
    $region41: #{fused_prompt_mlp.5} parent=1 // pred_fallthru
      _
    // Predicated region
    $region42: #{fused_prompt_mlp.5} parent=1 // pred_check
      _
    $region43: #{fused_prompt_mlp.5} parent=1 // pred_check_branch
      %44 = sbr.rel (0) target = $region45
    $region44: #{fused_prompt_mlp.5} parent=1 // pred_region
      _
    $region45: #{fused_prompt_mlp.5} parent=1 // pred_fallthru
      _
    // Predicated region
    $region46: #{fused_prompt_mlp.5} parent=1 // pred_check
      _
    $region47: #{fused_prompt_mlp.5} parent=1 // pred_check_branch
      %46 = sbr.rel (0) target = $region49
    $region48: #{fused_prompt_mlp.5} parent=1 // pred_region
      _
    $region49: #{fused_prompt_mlp.5} parent=1 // pred_fallthru
      _
    // Predicated region
    $region50: #{fused_prompt_mlp.5} parent=1 // pred_check
      _
    $region51: #{fused_prompt_mlp.5} parent=1 // pred_check_branch
      %48 = sbr.rel (0) target = $region53
    $region52: #{fused_prompt_mlp.5} parent=1 // pred_region
      _
    $region53: #{fused_prompt_mlp.5} parent=1 // pred_fallthru
      _
    // Predicated region
    $region54: #{fused_prompt_mlp.5} parent=1 // pred_check
      _
    $region55: #{fused_prompt_mlp.5} parent=1 // pred_check_branch
      %50 = sbr.rel (0) target = $region57
    $region56: #{fused_prompt_mlp.5} parent=1 // pred_region
      _
    $region57: #{fused_prompt_mlp.5} parent=1 // pred_fallthru
      _
    // Predicated region
    $region58: #{fused_prompt_mlp.5} parent=1 // pred_check
      _
    $region59: #{fused_prompt_mlp.5} parent=1 // pred_check_branch
      %52 = sbr.rel (0) target = $region61
    $region60: #{fused_prompt_mlp.5} parent=1 // pred_region
      _
    $region61: #{fused_prompt_mlp.5} parent=1 // pred_fallthru
      _
    // Predicated region
    $region62: #{fused_prompt_mlp.5} parent=1 // pred_check
      _
    $region63: #{fused_prompt_mlp.5} parent=1 // pred_check_branch
      %54 = sbr.rel (0) target = $region65
    $region64: #{fused_prompt_mlp.5} parent=1 // pred_region
      _
    $region65: #{fused_prompt_mlp.5} parent=1 // pred_fallthru
      _
    %v55 = vld [vmem:[%s0] sm:$0xff]
    %v56 = vld [vmem:[%s1] sm:$0xff]
    %v57 = vld [vmem:[%s2] sm:$0xff]
    %v58 = vld [vmem:[%s3] sm:$0xff]
    %v59 = vld [vmem:[%s4] sm:$0xff]
    %v60 = vld [vmem:[%s5] sm:$0xff]
    %v61 = vld [vmem:[%s5 + $0x8] sm:$0xff]
    %v62 = vld [vmem:[%s5 + $0x10] sm:$0xff]
    %v63 = vld [vmem:[%s5 + $0x18] sm:$0xff]
    %v64 = vld [vmem:[%s6] sm:$0xff]
    %v65 = vld [vmem:[%s6 + $0x8] sm:$0xff]
    %v66 = vld [vmem:[%s6 + $0x10] sm:$0xff]
    %v67 = vld [vmem:[%s6 + $0x18] sm:$0xff]
    %v68 = vld [vmem:[%s7] sm:$0x1]
    %v69 = vadd.f32 %v55, %v56
    %v70 = vadd.f32 %v57, %v58
    %v71 = vadd.f32 %v70, %v59
    %vm72 = vcmask 261120
    %v74 = vsel %vm72, %v71, 0
    %76 = vmatprep.subr.mxu0 0.0
    %77 = vmatpush1.msra.mxu0 0.0
    %78 = vmatprep.subr.mxu0 0.0
    %79 = vmatpush1.msra.mxu0 0.0
    %80 = vmatprep.subr.mxu0 0.0
    %81 = vmatpush1.msra.mxu0 0.0
    %82 = vmatprep.subr.mxu0 0.0
    %83 = vmatpush1.msra.mxu0 0.0
    %84 = vmatprep.subr.mxu0 0.0
    %85 = vmatpush1.msra.mxu0 0.0
    %86 = vmatprep.subr.mxu0 0.0
    %87 = vmatpush1.msra.mxu0 0.0
    %88 = vmatprep.subr.mxu0 0.0
    %89 = vmatpush1.msra.mxu0 0.0
    %90 = vmatprep.subr.mxu0 0.0
    %91 = vmatpush1.msra.mxu0 0.0
    %92 = vmatprep.subr.mxu0 0.0
    %93 = vmatpush1.msra.mxu0 0.0
    %94 = vmatprep.subr.mxu0 0.0
    %95 = vmatpush1.msra.mxu0 0.0
    %96 = vmatprep.subr.mxu0 0.0
    %97 = vmatpush1.msra.mxu0 0.0
    %98 = vmatprep.subr.mxu0 0.0
    %99 = vmatpush1.msra.mxu0 0.0
    %100 = vmatprep.subr.mxu0 0.0
    %101 = vmatpush1.msra.mxu0 %v67
    %102 = vmatprep.subr.mxu0 0.0
    %103 = vmatpush1.msra.mxu0 %v66
    %104 = vmatprep.subr.mxu0 0.0
    %105 = vmatpush1.msra.mxu0 %v65
    %106 = vmatprep.subr.mxu0 0.0
    %107 = vmatpush1.msra.mxu0 %v64
    %108 = vmatprep.subr.mxu0 0.0
    %109 = vmatpush2.msra.mxu0 0.0
    %110 = vmatprep.subr.mxu0 0.0
    %111 = vmatpush2.msra.mxu0 0.0
    %112 = vmatprep.subr.mxu0 0.0
    %113 = vmatpush2.msra.mxu0 0.0
    %114 = vmatprep.subr.mxu0 0.0
    %115 = vmatpush2.msra.mxu0 0.0
    %116 = vmatprep.subr.mxu0 0.0
    %117 = vmatpush2.msra.mxu0 0.0
    %118 = vmatprep.subr.mxu0 0.0
    %119 = vmatpush2.msra.mxu0 0.0
    %120 = vmatprep.subr.mxu0 0.0
    %121 = vmatpush2.msra.mxu0 0.0
    %122 = vmatprep.subr.mxu0 0.0
    %123 = vmatpush2.msra.mxu0 0.0
    %124 = vmatprep.subr.mxu0 0.0
    %125 = vmatpush2.msra.mxu0 0.0
    %126 = vmatprep.subr.mxu0 0.0
    %127 = vmatpush2.msra.mxu0 0.0
    %128 = vmatprep.subr.mxu0 0.0
    %129 = vmatpush2.msra.mxu0 0.0
    %130 = vmatprep.subr.mxu0 0.0
    %131 = vmatpush2.msra.mxu0 0.0
    %132 = vmatprep.subr.mxu0 0.0
    %133 = vmatpush2.msra.mxu0 0.0
    %134 = vmatprep.subr.mxu0 0.0
    %135 = vmatpush2.msra.mxu0 0.0
    %136 = vmatprep.subr.mxu0 0.0
    %137 = vmatpush2.msra.mxu0 0.0
    %138 = vmatprep.subr.mxu0 0.0
    %139 = vmatpush2.msra.mxu0 0.0
    %140 = vmatprep.mubr.f32.mxu0 0.0
    %141 = vmatmul.mubr.f32.gmra.mxu0 %v74
    %v142 = vpop.f32.mrf.mxu0
    %v143 = vadd.f32 0.0, %v142
    %v144 = vpop.f32.mrf.mxu0
    %145 = vdwg.mxu0
    %v147 = vsel %vm72, %v69, 0
    %149 = vmatprep.subr.mxu0 0.0
    %150 = vmatpush1.msra.mxu0 0.0
    %151 = vmatprep.subr.mxu0 0.0
    %152 = vmatpush1.msra.mxu0 0.0
    %153 = vmatprep.subr.mxu0 0.0
    %154 = vmatpush1.msra.mxu0 0.0
    %155 = vmatprep.subr.mxu0 0.0
    %156 = vmatpush1.msra.mxu0 0.0
    %157 = vmatprep.subr.mxu0 0.0
    %158 = vmatpush1.msra.mxu0 0.0
    %159 = vmatprep.subr.mxu0 0.0
    %160 = vmatpush1.msra.mxu0 0.0
    %161 = vmatprep.subr.mxu0 0.0
    %162 = vmatpush1.msra.mxu0 0.0
    %163 = vmatprep.subr.mxu0 0.0
    %164 = vmatpush1.msra.mxu0 0.0
    %165 = vmatprep.subr.mxu0 0.0
    %166 = vmatpush1.msra.mxu0 0.0
    %167 = vmatprep.subr.mxu0 0.0
    %168 = vmatpush1.msra.mxu0 0.0
    %169 = vmatprep.subr.mxu0 0.0
    %170 = vmatpush1.msra.mxu0 0.0
    %171 = vmatprep.subr.mxu0 0.0
    %172 = vmatpush1.msra.mxu0 0.0
    %173 = vmatprep.subr.mxu0 0.0
    %174 = vmatpush1.msra.mxu0 %v63
    %175 = vmatprep.subr.mxu0 0.0
    %176 = vmatpush1.msra.mxu0 %v62
    %177 = vmatprep.subr.mxu0 0.0
    %178 = vmatpush1.msra.mxu0 %v61
    %179 = vmatprep.subr.mxu0 0.0
    %180 = vmatpush1.msra.mxu0 %v60
    %181 = vmatprep.subr.mxu0 0.0
    %182 = vmatpush2.msra.mxu0 0.0
    %183 = vmatprep.subr.mxu0 0.0
    %184 = vmatpush2.msra.mxu0 0.0
    %185 = vmatprep.subr.mxu0 0.0
    %186 = vmatpush2.msra.mxu0 0.0
    %187 = vmatprep.subr.mxu0 0.0
    %188 = vmatpush2.msra.mxu0 0.0
    %189 = vmatprep.subr.mxu0 0.0
    %190 = vmatpush2.msra.mxu0 0.0
    %191 = vmatprep.subr.mxu0 0.0
    %192 = vmatpush2.msra.mxu0 0.0
    %193 = vmatprep.subr.mxu0 0.0
    %194 = vmatpush2.msra.mxu0 0.0
    %195 = vmatprep.subr.mxu0 0.0
    %196 = vmatpush2.msra.mxu0 0.0
    %197 = vmatprep.subr.mxu0 0.0
    %198 = vmatpush2.msra.mxu0 0.0
    %199 = vmatprep.subr.mxu0 0.0
    %200 = vmatpush2.msra.mxu0 0.0
    %201 = vmatprep.subr.mxu0 0.0
    %202 = vmatpush2.msra.mxu0 0.0
    %203 = vmatprep.subr.mxu0 0.0
    %204 = vmatpush2.msra.mxu0 0.0
    %205 = vmatprep.subr.mxu0 0.0
    %206 = vmatpush2.msra.mxu0 0.0
    %207 = vmatprep.subr.mxu0 0.0
    %208 = vmatpush2.msra.mxu0 0.0
    %209 = vmatprep.subr.mxu0 0.0
    %210 = vmatpush2.msra.mxu0 0.0
    %211 = vmatprep.subr.mxu0 0.0
    %212 = vmatpush2.msra.mxu0 0.0
    %213 = vmatprep.mubr.f32.mxu0 0.0
    %214 = vmatmul.mubr.f32.gmra.mxu0 %v147
    %v215 = vpop.f32.mrf.mxu0
    %v216 = vadd.f32 %v143, %v215
    %v217 = vpop.f32.mrf.mxu0
    %218 = vdwg.mxu0
    %v220 = vlaneseq
    %v221 = vshrl.u32 %v220, 7
    %v222 = vsub.s32 0, %v221
    %v223 = vrot.slane %v68, %v222
    %v225 = vadd.f32 %v216, %v223
    %v226 = vmax.f32 %v225, 0.0
    %v227 = vld [vmem:[%s8] sm:$0x1]
    %v229 = vlaneseq
    %v230 = vshrl.u32 %v229, 7
    %v231 = vsub.s32 0, %v230
    %v232 = vrot.slane %v227, %v231
    %v234 = vmul.f32 %v226, %v232
    %v235 = vld [vmem:[%s9] sm:$0x1]
    %v237 = vlaneseq
    %v238 = vshrl.u32 %v237, 7
    %v239 = vsub.s32 0, %v238
    %v240 = vrot.slane %v235, %v239
    %v242 = vadd.f32 %v234, %v240
    %v243 = vld [vmem:[%s10] sm:$0xff]
    %v244 = vld [vmem:[%s10 + $0x8] sm:$0xff]
    %v245 = vld [vmem:[%s10 + $0x10] sm:$0xff]
    %v246 = vld [vmem:[%s10 + $0x18] sm:$0xff]
    %v247 = vld [vmem:[%s10 + $0x20] sm:$0xff]
    %v248 = vld [vmem:[%s10 + $0x28] sm:$0xff]
    %v249 = vld [vmem:[%s10 + $0x30] sm:$0xff]
    %v250 = vld [vmem:[%s10 + $0x38] sm:$0xff]
    %v251 = vld [vmem:[%s10 + $0x40] sm:$0xff]
    %v252 = vld [vmem:[%s10 + $0x48] sm:$0xff]
    %v253 = vld [vmem:[%s10 + $0x50] sm:$0xff]
    %v254 = vld [vmem:[%s10 + $0x58] sm:$0xff]
    %v255 = vld [vmem:[%s10 + $0x60] sm:$0xff]
    %v256 = vld [vmem:[%s10 + $0x68] sm:$0xff]
    %v257 = vld [vmem:[%s10 + $0x70] sm:$0xff]
    %v258 = vld [vmem:[%s10 + $0x78] sm:$0xff]
    %v259 = vld [vmem:[%s11] sm:$0x1]
    %v261 = vlaneseq
    %v262 = vshrl.u32 %v261, 7
    %v263 = vsub.s32 0, %v262
    %v264 = vrot.slane %v259, %v263
    %266 = vmatprep.subr.mxu0 0.0
    %267 = vmatpush1.msra.mxu0 %v258
    %268 = vmatprep.subr.mxu0 0.0
    %269 = vmatpush1.msra.mxu0 %v257
    %270 = vmatprep.subr.mxu0 0.0
    %271 = vmatpush1.msra.mxu0 %v256
    %272 = vmatprep.subr.mxu0 0.0
    %273 = vmatpush1.msra.mxu0 %v255
    %274 = vmatprep.subr.mxu0 0.0
    %275 = vmatpush1.msra.mxu0 %v254
    %276 = vmatprep.subr.mxu0 0.0
    %277 = vmatpush1.msra.mxu0 %v253
    %278 = vmatprep.subr.mxu0 0.0
    %279 = vmatpush1.msra.mxu0 %v252
    %280 = vmatprep.subr.mxu0 0.0
    %281 = vmatpush1.msra.mxu0 %v251
    %282 = vmatprep.subr.mxu0 0.0
    %283 = vmatpush1.msra.mxu0 %v250
    %284 = vmatprep.subr.mxu0 0.0
    %285 = vmatpush1.msra.mxu0 %v249
    %286 = vmatprep.subr.mxu0 0.0
    %287 = vmatpush1.msra.mxu0 %v248
    %288 = vmatprep.subr.mxu0 0.0
    %289 = vmatpush1.msra.mxu0 %v247
    %290 = vmatprep.subr.mxu0 0.0
    %291 = vmatpush1.msra.mxu0 %v246
    %292 = vmatprep.subr.mxu0 0.0
    %293 = vmatpush1.msra.mxu0 %v245
    %294 = vmatprep.subr.mxu0 0.0
    %295 = vmatpush1.msra.mxu0 %v244
    %296 = vmatprep.subr.mxu0 0.0
    %297 = vmatpush1.msra.mxu0 %v243
    %298 = vmatprep.subr.mxu0 0.0
    %299 = vmatpush2.msra.mxu0 0.0
    %300 = vmatprep.subr.mxu0 0.0
    %301 = vmatpush2.msra.mxu0 0.0
    %302 = vmatprep.subr.mxu0 0.0
    %303 = vmatpush2.msra.mxu0 0.0
    %304 = vmatprep.subr.mxu0 0.0
    %305 = vmatpush2.msra.mxu0 0.0
    %306 = vmatprep.subr.mxu0 0.0
    %307 = vmatpush2.msra.mxu0 0.0
    %308 = vmatprep.subr.mxu0 0.0
    %309 = vmatpush2.msra.mxu0 0.0
    %310 = vmatprep.subr.mxu0 0.0
    %311 = vmatpush2.msra.mxu0 0.0
    %312 = vmatprep.subr.mxu0 0.0
    %313 = vmatpush2.msra.mxu0 0.0
    %314 = vmatprep.subr.mxu0 0.0
    %315 = vmatpush2.msra.mxu0 0.0
    %316 = vmatprep.subr.mxu0 0.0
    %317 = vmatpush2.msra.mxu0 0.0
    %318 = vmatprep.subr.mxu0 0.0
    %319 = vmatpush2.msra.mxu0 0.0
    %320 = vmatprep.subr.mxu0 0.0
    %321 = vmatpush2.msra.mxu0 0.0
    %322 = vmatprep.subr.mxu0 0.0
    %323 = vmatpush2.msra.mxu0 0.0
    %324 = vmatprep.subr.mxu0 0.0
    %325 = vmatpush2.msra.mxu0 0.0
    %326 = vmatprep.subr.mxu0 0.0
    %327 = vmatpush2.msra.mxu0 0.0
    %328 = vmatprep.subr.mxu0 0.0
    %329 = vmatpush2.msra.mxu0 0.0
    %330 = vmatprep.mubr.f32.mxu0 0.0
    %331 = vmatmul.mubr.f32.gmra.mxu0 %v242
    %v332 = vpop.f32.mrf.mxu0
    %v333 = vadd.f32 %v264, %v332
    %v334 = vpop.f32.mrf.mxu0
    %335 = vdwg.mxu0
    %v336 = vmax.f32 %v333, 0.0
    %v337 = vld [vmem:[%s12] sm:$0x1]
    %v339 = vlaneseq
    %v340 = vshrl.u32 %v339, 7
    %v341 = vsub.s32 0, %v340
    %v342 = vrot.slane %v337, %v341
    %v344 = vmul.f32 %v336, %v342
    %v345 = vld [vmem:[%s13] sm:$0x1]
    %v347 = vlaneseq
    %v348 = vshrl.u32 %v347, 7
    %v349 = vsub.s32 0, %v348
    %v350 = vrot.slane %v345, %v349
    %v352 = vadd.f32 %v344, %v350
    %v353 = vld [vmem:[%s14] sm:$0x1]
    %s354 = sld [smem:[#allocation2]]
    %v355 = vstv %s354
    %356 = vmatprep.subr.mxu0 0.0
    %357 = vmatpush1.xpose.msra.mxu0 0.0
    %358 = vmatprep.subr.mxu0 0.0
    %359 = vmatpush1.xpose.msra.mxu0 0.0
    %360 = vmatprep.subr.mxu0 0.0
    %361 = vmatpush1.xpose.msra.mxu0 0.0
    %362 = vmatprep.subr.mxu0 0.0
    %363 = vmatpush1.xpose.msra.mxu0 0.0
    %364 = vmatprep.subr.mxu0 0.0
    %365 = vmatpush1.xpose.msra.mxu0 0.0
    %366 = vmatprep.subr.mxu0 0.0
    %367 = vmatpush1.xpose.msra.mxu0 0.0
    %368 = vmatprep.subr.mxu0 0.0
    %369 = vmatpush1.xpose.msra.mxu0 0.0
    %370 = vmatprep.subr.mxu0 0.0
    %371 = vmatpush1.xpose.msra.mxu0 0.0
    %372 = vmatprep.subr.mxu0 0.0
    %373 = vmatpush1.xpose.msra.mxu0 0.0
    %374 = vmatprep.subr.mxu0 0.0
    %375 = vmatpush1.xpose.msra.mxu0 0.0
    %376 = vmatprep.subr.mxu0 0.0
    %377 = vmatpush1.xpose.msra.mxu0 0.0
    %378 = vmatprep.subr.mxu0 0.0
    %379 = vmatpush1.xpose.msra.mxu0 0.0
    %380 = vmatprep.subr.mxu0 0.0
    %381 = vmatpush1.xpose.msra.mxu0 0.0
    %382 = vmatprep.subr.mxu0 0.0
    %383 = vmatpush1.xpose.msra.mxu0 0.0
    %384 = vmatprep.subr.mxu0 0.0
    %385 = vmatpush1.xpose.msra.mxu0 0.0
    %386 = vmatprep.subr.mxu0 0.0
    %387 = vmatpush1.xpose.msra.mxu0 %v352
    %388 = vmatprep.subr.mxu0 0.0
    %389 = vmatpush2.xpose.msra.mxu0 0.0
    %390 = vmatprep.subr.mxu0 0.0
    %391 = vmatpush2.xpose.msra.mxu0 0.0
    %392 = vmatprep.subr.mxu0 0.0
    %393 = vmatpush2.xpose.msra.mxu0 0.0
    %394 = vmatprep.subr.mxu0 0.0
    %395 = vmatpush2.xpose.msra.mxu0 0.0
    %396 = vmatprep.subr.mxu0 0.0
    %397 = vmatpush2.xpose.msra.mxu0 0.0
    %398 = vmatprep.subr.mxu0 0.0
    %399 = vmatpush2.xpose.msra.mxu0 0.0
    %400 = vmatprep.subr.mxu0 0.0
    %401 = vmatpush2.xpose.msra.mxu0 0.0
    %402 = vmatprep.subr.mxu0 0.0
    %403 = vmatpush2.xpose.msra.mxu0 0.0
    %404 = vmatprep.subr.mxu0 0.0
    %405 = vmatpush2.xpose.msra.mxu0 0.0
    %406 = vmatprep.subr.mxu0 0.0
    %407 = vmatpush2.xpose.msra.mxu0 0.0
    %408 = vmatprep.subr.mxu0 0.0
    %409 = vmatpush2.xpose.msra.mxu0 0.0
    %410 = vmatprep.subr.mxu0 0.0
    %411 = vmatpush2.xpose.msra.mxu0 0.0
    %412 = vmatprep.subr.mxu0 0.0
    %413 = vmatpush2.xpose.msra.mxu0 0.0
    %414 = vmatprep.subr.mxu0 0.0
    %415 = vmatpush2.xpose.msra.mxu0 0.0
    %416 = vmatprep.subr.mxu0 0.0
    %417 = vmatpush2.xpose.msra.mxu0 0.0
    %418 = vmatprep.subr.mxu0 0.0
    %419 = vmatpush2.xpose.msra.mxu0 0.0
    %420 = vmatprep.mubr.f32.mxu0 0.0
    %421 = vmatmul.mubr.f32.gmra.mxu0 %v353
    %v422 = vpop.f32.mrf.mxu0
    %v423 = vadd.f32 %v355, %v422
    %v424 = vpop.f32.mrf.mxu0
    %425 = vdwg.mxu0
    %v426 = vxor.u32 %v423, 2147483648
    %v427 = vmul.f32 %v426, 1.442695
    %v428 = vpow.pop %v427
    %v429 = vadd.f32 %v428, 1.0
    %v430 = vrcp.pop %v429
    %v431 = vmul.f32 1.0, %v430
    %vm432 = vcmask 57344
    %433 = vst.msk [vmem:[#allocation3] sm:$0x1] %vm432, %v431
    // Predicated region
    $region66: #{fused_prompt_mlp.5} parent=1 // pred_check
      _
    $region67: #{fused_prompt_mlp.5} parent=1 // pred_check_branch
      %435 = sbr.rel (0) target = $region69
    $region68: #{fused_prompt_mlp.5} parent=1 // pred_region
      %s437 = ssub.s32 16, 16
      %438 = vsyncadd [#allocation4], %s437
      %s440 = sshll.u32 [#allocation3], 4
      %s441 = int_to_ptr.vmem [resolvable:$true] %s440
      %443 = dma.vmem_to_hbm [thread:$0]  %s441, 16, %s16, [#allocation4]
    $region69: #{fused_prompt_mlp.5} parent=1 // pred_fallthru
      _
    // Predicated region
    $region70: #{fused_prompt_mlp.5} parent=1 // pred_check
      _
    $region71: #{fused_prompt_mlp.5} parent=1 // pred_check_branch
      %445 = sbr.rel (0) target = $region73
    $region72: #{fused_prompt_mlp.5} parent=1 // pred_region
      %446 = dma.done [#allocation4], 16
    $region73: #{fused_prompt_mlp.5} parent=1 // pred_fallthru
      _
    %447 = vsyncpa [#allocation4], 1

// kernel: fused_prompt_mlp.3
$region0: #{fused_prompt_mlp.3}
  #allocation0 [shape = 'u32[]', space=smem, size = 0x4, offset = 0x4, fixed_abs, tag = 'smem constant byte address 0x4 - core index']
  #allocation1 [shape = 'u32[144,128]{1,0:T(1,128)}', space=vmem, size = 0x12000, scoped, tag = 'internal scratch']
  %s0 = inlined_call_operand.vmem [shape: f32[8,32], index: 0, kind: input, shape index: {}]
  %s1 = inlined_call_operand.vmem [shape: f32[8,32], index: 1, kind: input, shape index: {}]
  %s2 = inlined_call_operand.hbm [shape: f32[8,32], index: 2, kind: input, shape index: {}]
  %s3 = inlined_call_operand.vmem [shape: f32[8,32], index: 3, kind: input, shape index: {}]
  %s4 = inlined_call_operand.hbm [shape: f32[8,32], index: 4, kind: input, shape index: {}]
  %s5 = inlined_call_operand.hbm [shape: f32[32,128], index: 5, kind: input, shape index: {}]
  %s6 = inlined_call_operand.hbm [shape: f32[32,128], index: 6, kind: input, shape index: {}]
  %s7 = inlined_call_operand.vmem [shape: f32[1,128], index: 7, kind: input, shape index: {}]
  %s8 = inlined_call_operand.vmem [shape: f32[1,1,128], index: 8, kind: output, shape index: {0}]
  %s9 = inlined_call_operand.vmem [shape: f32[1,1,128], index: 9, kind: output, shape index: {1}]
  %10 = xla_tuple %s8, %s9
  %s11 = sld [smem:[#allocation0]]
  $region66: #{fused_prompt_mlp.3} parent=0
    _
  %s13 = ssub.s32 1, %s11
  %s14 = scalar_select 0, %s13, %s11
  $region1: #{fused_prompt_mlp.3} parent=0
    #allocation2 [shape = 'u8[4096]{0}', space=vmem, size = 0x1000, scoped, tag = 'input window, operand 2, single buffered']
    #allocation3 [shape = 's32[1]{0}', space=sflag, size = 0x4, scoped, tag = 'scoped memory for fused_prompt_mlp.3']
    #allocation4 [shape = 'u8[4096]{0}', space=vmem, size = 0x1000, scoped, tag = 'input window, operand 4, single buffered']
    #allocation5 [shape = 's32[1]{0}', space=sflag, size = 0x4, scoped, tag = 'scoped memory for fused_prompt_mlp.3']
    #allocation6 [shape = 'u8[16384]{0}', space=vmem, size = 0x4000, scoped, tag = 'input window, operand 5, single buffered']
    #allocation7 [shape = 'u8[16384]{0}', space=vmem, size = 0x4000, scoped, tag = 'input window, operand 6, single buffered']
    #allocation8 [shape = 's32[1]{0}', space=sflag, size = 0x4, scoped, tag = 'scoped memory for fused_prompt_mlp.3']
    %15 = vsyncpa [#allocation3], 0
    %16 = vsyncpa [#allocation5], 0
    %17 = vsyncpa [#allocation8], 0
    // Predicated region
    $region2: #{fused_prompt_mlp.3} parent=1 // pred_check
      _
    $region3: #{fused_prompt_mlp.3} parent=1 // pred_check_branch
      %19 = sbr.rel (0) target = $region5
    $region4: #{fused_prompt_mlp.3} parent=1 // pred_region
      _
    $region5: #{fused_prompt_mlp.3} parent=1 // pred_fallthru
      _
    // Predicated region
    $region6: #{fused_prompt_mlp.3} parent=1 // pred_check
      _
    $region7: #{fused_prompt_mlp.3} parent=1 // pred_check_branch
      %21 = sbr.rel (0) target = $region9
    $region8: #{fused_prompt_mlp.3} parent=1 // pred_region
      _
    $region9: #{fused_prompt_mlp.3} parent=1 // pred_fallthru
      _
    // Predicated region
    $region10: #{fused_prompt_mlp.3} parent=1 // pred_check
      _
    $region11: #{fused_prompt_mlp.3} parent=1 // pred_check_branch
      %23 = sbr.rel (0) target = $region13
    $region12: #{fused_prompt_mlp.3} parent=1 // pred_region
      %s25 = ssub.s32 128, 128
      %26 = vsyncadd [#allocation3], %s25
      %s28 = sshll.u32 [#allocation2], 4
      %s29 = int_to_ptr.vmem [resolvable:$true] %s28
      %31 = dma.hbm_to_vmem [thread:$0]  %s2, 128, %s29, [#allocation3]
    $region13: #{fused_prompt_mlp.3} parent=1 // pred_fallthru
      _
    // Predicated region
    $region14: #{fused_prompt_mlp.3} parent=1 // pred_check
      _
    $region15: #{fused_prompt_mlp.3} parent=1 // pred_check_branch
      %33 = sbr.rel (0) target = $region17
    $region16: #{fused_prompt_mlp.3} parent=1 // pred_region
      _
    $region17: #{fused_prompt_mlp.3} parent=1 // pred_fallthru
      _
    // Predicated region
    $region18: #{fused_prompt_mlp.3} parent=1 // pred_check
      _
    $region19: #{fused_prompt_mlp.3} parent=1 // pred_check_branch
      %35 = sbr.rel (0) target = $region21
    $region20: #{fused_prompt_mlp.3} parent=1 // pred_region
      %s37 = ssub.s32 128, 128
      %38 = vsyncadd [#allocation5], %s37
      %s40 = sshll.u32 [#allocation4], 4
      %s41 = int_to_ptr.vmem [resolvable:$true] %s40
      %43 = dma.hbm_to_vmem [thread:$0]  %s4, 128, %s41, [#allocation5]
    $region21: #{fused_prompt_mlp.3} parent=1 // pred_fallthru
      _
    // Predicated region
    $region22: #{fused_prompt_mlp.3} parent=1 // pred_check
      _
    $region23: #{fused_prompt_mlp.3} parent=1 // pred_check_branch
      %45 = sbr.rel (0) target = $region25
    $region24: #{fused_prompt_mlp.3} parent=1 // pred_region
      %s47 = ssub.s32 512, 512
      %48 = vsyncadd [#allocation5], %s47
      %s49 = sshll.u32 [#allocation6], 4
      %s50 = int_to_ptr.vmem [resolvable:$true] %s49
      %55 = dma.hbm_to_vmem [thread:$0]  %s5, 512, %s50, [#allocation5], 128, 128, 8
    $region25: #{fused_prompt_mlp.3} parent=1 // pred_fallthru
      _
    // Predicated region
    $region26: #{fused_prompt_mlp.3} parent=1 // pred_check
      _
    $region27: #{fused_prompt_mlp.3} parent=1 // pred_check_branch
      %57 = sbr.rel (0) target = $region29
    $region28: #{fused_prompt_mlp.3} parent=1 // pred_region
      %s59 = ssub.s32 512, 512
      %60 = vsyncadd [#allocation8], %s59
      %s61 = sshll.u32 [#allocation7], 4
      %s62 = int_to_ptr.vmem [resolvable:$true] %s61
      %67 = dma.hbm_to_vmem [thread:$0]  %s6, 512, %s62, [#allocation8], 128, 128, 8
    $region29: #{fused_prompt_mlp.3} parent=1 // pred_fallthru
      _
    // Predicated region
    $region30: #{fused_prompt_mlp.3} parent=1 // pred_check
      _
    $region31: #{fused_prompt_mlp.3} parent=1 // pred_check_branch
      %69 = sbr.rel (0) target = $region33
    $region32: #{fused_prompt_mlp.3} parent=1 // pred_region
      _
    $region33: #{fused_prompt_mlp.3} parent=1 // pred_fallthru
      _
    // Predicated region
    $region34: #{fused_prompt_mlp.3} parent=1 // pred_check
      _
    $region35: #{fused_prompt_mlp.3} parent=1 // pred_check_branch
      %71 = sbr.rel (0) target = $region37
    $region36: #{fused_prompt_mlp.3} parent=1 // pred_region
      %72 = dma.done [#allocation3], 128
    $region37: #{fused_prompt_mlp.3} parent=1 // pred_fallthru
      _
    // Predicated region
    $region38: #{fused_prompt_mlp.3} parent=1 // pred_check
      _
    $region39: #{fused_prompt_mlp.3} parent=1 // pred_check_branch
      %74 = sbr.rel (0) target = $region41
    $region40: #{fused_prompt_mlp.3} parent=1 // pred_region
      %75 = dma.done [#allocation5], 128
    $region41: #{fused_prompt_mlp.3} parent=1 // pred_fallthru
      _
    // Predicated region
    $region42: #{fused_prompt_mlp.3} parent=1 // pred_check
      _
    $region43: #{fused_prompt_mlp.3} parent=1 // pred_check_branch
      %77 = sbr.rel (0) target = $region45
    $region44: #{fused_prompt_mlp.3} parent=1 // pred_region
      %78 = dma.done [#allocation5], 512
    $region45: #{fused_prompt_mlp.3} parent=1 // pred_fallthru
      _
    // Predicated region
    $region46: #{fused_prompt_mlp.3} parent=1 // pred_check
      _
    $region47: #{fused_prompt_mlp.3} parent=1 // pred_check_branch
      %80 = sbr.rel (0) target = $region49
    $region48: #{fused_prompt_mlp.3} parent=1 // pred_region
      %81 = dma.done [#allocation8], 512
    $region49: #{fused_prompt_mlp.3} parent=1 // pred_fallthru
      _
    %v82 = vld [vmem:[%s0] sm:$0xff]
    %v83 = vld [vmem:[%s1] sm:$0xff]
    %v84 = vld [vmem:[#allocation2] sm:$0xff]
    %v85 = vld [vmem:[%s3] sm:$0xff]
    %v86 = vld [vmem:[#allocation4] sm:$0xff]
    %v87 = vld [vmem:[#allocation6] sm:$0xff]
    %v88 = vld [vmem:[#allocation6 + $0x8] sm:$0xff]
    %v89 = vld [vmem:[#allocation6 + $0x10] sm:$0xff]
    %v90 = vld [vmem:[#allocation6 + $0x18] sm:$0xff]
    %v91 = vld [vmem:[#allocation7] sm:$0xff]
    %v92 = vld [vmem:[#allocation7 + $0x8] sm:$0xff]
    %v93 = vld [vmem:[#allocation7 + $0x10] sm:$0xff]
    %v94 = vld [vmem:[#allocation7 + $0x18] sm:$0xff]
    %v95 = vld [vmem:[%s7] sm:$0x1]
    %v96 = vadd.f32 %v82, %v83
    %v97 = vadd.f32 %v84, %v85
    %v98 = vadd.f32 %v97, %v86
    %vm99 = vcmask 261120
    %v101 = vsel %vm99, %v98, 0
    %103 = vmatprep.subr.mxu0 0.0
    %104 = vmatpush1.msra.mxu0 0.0
    %105 = vmatprep.subr.mxu0 0.0
    %106 = vmatpush1.msra.mxu0 0.0
    %107 = vmatprep.subr.mxu0 0.0
    %108 = vmatpush1.msra.mxu0 0.0
    %109 = vmatprep.subr.mxu0 0.0
    %110 = vmatpush1.msra.mxu0 0.0
    %111 = vmatprep.subr.mxu0 0.0
    %112 = vmatpush1.msra.mxu0 0.0
    %113 = vmatprep.subr.mxu0 0.0
    %114 = vmatpush1.msra.mxu0 0.0
    %115 = vmatprep.subr.mxu0 0.0
    %116 = vmatpush1.msra.mxu0 0.0
    %117 = vmatprep.subr.mxu0 0.0
    %118 = vmatpush1.msra.mxu0 0.0
    %119 = vmatprep.subr.mxu0 0.0
    %120 = vmatpush1.msra.mxu0 0.0
    %121 = vmatprep.subr.mxu0 0.0
    %122 = vmatpush1.msra.mxu0 0.0
    %123 = vmatprep.subr.mxu0 0.0
    %124 = vmatpush1.msra.mxu0 0.0
    %125 = vmatprep.subr.mxu0 0.0
    %126 = vmatpush1.msra.mxu0 0.0
    %127 = vmatprep.subr.mxu0 0.0
    %128 = vmatpush1.msra.mxu0 %v94
    %129 = vmatprep.subr.mxu0 0.0
    %130 = vmatpush1.msra.mxu0 %v93
    %131 = vmatprep.subr.mxu0 0.0
    %132 = vmatpush1.msra.mxu0 %v92
    %133 = vmatprep.subr.mxu0 0.0
    %134 = vmatpush1.msra.mxu0 %v91
    %135 = vmatprep.subr.mxu0 0.0
    %136 = vmatpush2.msra.mxu0 0.0
    %137 = vmatprep.subr.mxu0 0.0
    %138 = vmatpush2.msra.mxu0 0.0
    %139 = vmatprep.subr.mxu0 0.0
    %140 = vmatpush2.msra.mxu0 0.0
    %141 = vmatprep.subr.mxu0 0.0
    %142 = vmatpush2.msra.mxu0 0.0
    %143 = vmatprep.subr.mxu0 0.0
    %144 = vmatpush2.msra.mxu0 0.0
    %145 = vmatprep.subr.mxu0 0.0
    %146 = vmatpush2.msra.mxu0 0.0
    %147 = vmatprep.subr.mxu0 0.0
    %148 = vmatpush2.msra.mxu0 0.0
    %149 = vmatprep.subr.mxu0 0.0
    %150 = vmatpush2.msra.mxu0 0.0
    %151 = vmatprep.subr.mxu0 0.0
    %152 = vmatpush2.msra.mxu0 0.0
    %153 = vmatprep.subr.mxu0 0.0
    %154 = vmatpush2.msra.mxu0 0.0
    %155 = vmatprep.subr.mxu0 0.0
    %156 = vmatpush2.msra.mxu0 0.0
    %157 = vmatprep.subr.mxu0 0.0
    %158 = vmatpush2.msra.mxu0 0.0
    %159 = vmatprep.subr.mxu0 0.0
    %160 = vmatpush2.msra.mxu0 0.0
    %161 = vmatprep.subr.mxu0 0.0
    %162 = vmatpush2.msra.mxu0 0.0
    %163 = vmatprep.subr.mxu0 0.0
    %164 = vmatpush2.msra.mxu0 0.0
    %165 = vmatprep.subr.mxu0 0.0
    %166 = vmatpush2.msra.mxu0 0.0
    %167 = vmatprep.mubr.f32.mxu0 0.0
    %168 = vmatmul.mubr.f32.gmra.mxu0 %v101
    %v169 = vpop.f32.mrf.mxu0
    %v170 = vadd.f32 0.0, %v169
    %v171 = vpop.f32.mrf.mxu0
    %172 = vdwg.mxu0
    %v174 = vsel %vm99, %v96, 0
    %176 = vmatprep.subr.mxu0 0.0
    %177 = vmatpush1.msra.mxu0 0.0
    %178 = vmatprep.subr.mxu0 0.0
    %179 = vmatpush1.msra.mxu0 0.0
    %180 = vmatprep.subr.mxu0 0.0
    %181 = vmatpush1.msra.mxu0 0.0
    %182 = vmatprep.subr.mxu0 0.0
    %183 = vmatpush1.msra.mxu0 0.0
    %184 = vmatprep.subr.mxu0 0.0
    %185 = vmatpush1.msra.mxu0 0.0
    %186 = vmatprep.subr.mxu0 0.0
    %187 = vmatpush1.msra.mxu0 0.0
    %188 = vmatprep.subr.mxu0 0.0
    %189 = vmatpush1.msra.mxu0 0.0
    %190 = vmatprep.subr.mxu0 0.0
    %191 = vmatpush1.msra.mxu0 0.0
    %192 = vmatprep.subr.mxu0 0.0
    %193 = vmatpush1.msra.mxu0 0.0
    %194 = vmatprep.subr.mxu0 0.0
    %195 = vmatpush1.msra.mxu0 0.0
    %196 = vmatprep.subr.mxu0 0.0
    %197 = vmatpush1.msra.mxu0 0.0
    %198 = vmatprep.subr.mxu0 0.0
    %199 = vmatpush1.msra.mxu0 0.0
    %200 = vmatprep.subr.mxu0 0.0
    %201 = vmatpush1.msra.mxu0 %v90
    %202 = vmatprep.subr.mxu0 0.0
    %203 = vmatpush1.msra.mxu0 %v89
    %204 = vmatprep.subr.mxu0 0.0
    %205 = vmatpush1.msra.mxu0 %v88
    %206 = vmatprep.subr.mxu0 0.0
    %207 = vmatpush1.msra.mxu0 %v87
    %208 = vmatprep.subr.mxu0 0.0
    %209 = vmatpush2.msra.mxu0 0.0
    %210 = vmatprep.subr.mxu0 0.0
    %211 = vmatpush2.msra.mxu0 0.0
    %212 = vmatprep.subr.mxu0 0.0
    %213 = vmatpush2.msra.mxu0 0.0
    %214 = vmatprep.subr.mxu0 0.0
    %215 = vmatpush2.msra.mxu0 0.0
    %216 = vmatprep.subr.mxu0 0.0
    %217 = vmatpush2.msra.mxu0 0.0
    %218 = vmatprep.subr.mxu0 0.0
    %219 = vmatpush2.msra.mxu0 0.0
    %220 = vmatprep.subr.mxu0 0.0
    %221 = vmatpush2.msra.mxu0 0.0
    %222 = vmatprep.subr.mxu0 0.0
    %223 = vmatpush2.msra.mxu0 0.0
    %224 = vmatprep.subr.mxu0 0.0
    %225 = vmatpush2.msra.mxu0 0.0
    %226 = vmatprep.subr.mxu0 0.0
    %227 = vmatpush2.msra.mxu0 0.0
    %228 = vmatprep.subr.mxu0 0.0
    %229 = vmatpush2.msra.mxu0 0.0
    %230 = vmatprep.subr.mxu0 0.0
    %231 = vmatpush2.msra.mxu0 0.0
    %232 = vmatprep.subr.mxu0 0.0
    %233 = vmatpush2.msra.mxu0 0.0
    %234 = vmatprep.subr.mxu0 0.0
    %235 = vmatpush2.msra.mxu0 0.0
    %236 = vmatprep.subr.mxu0 0.0
    %237 = vmatpush2.msra.mxu0 0.0
    %238 = vmatprep.subr.mxu0 0.0
    %239 = vmatpush2.msra.mxu0 0.0
    %240 = vmatprep.mubr.f32.mxu0 0.0
    %241 = vmatmul.mubr.f32.gmra.mxu0 %v174
    %v242 = vpop.f32.mrf.mxu0
    %v243 = vadd.f32 %v170, %v242
    %v244 = vpop.f32.mrf.mxu0
    %245 = vdwg.mxu0
    %v247 = vlaneseq
    %v248 = vshrl.u32 %v247, 7
    %v249 = vsub.s32 0, %v248
    %v250 = vrot.slane %v95, %v249
    %v252 = vadd.f32 %v243, %v250
    %v253 = vmax.f32 %v252, 0.0
    %v254 = vrot.slane %v253, 4
    %v255 = vadd.f32 %v253, %v254
    %v256 = vrot.slane %v255, 2
    %v257 = vadd.f32 %v255, %v256
    %v258 = vrot.slane %v257, 1
    %v259 = vadd.f32 %v257, %v258
    %260 = vst [vmem:[%s8] sm:$0x1] %v259
    %v261 = vmul.f32 %v253, %v253
    %v262 = vrot.slane %v261, 4
    %v263 = vadd.f32 %v261, %v262
    %v264 = vrot.slane %v263, 2
    %v265 = vadd.f32 %v263, %v264
    %v266 = vrot.slane %v265, 1
    %v267 = vadd.f32 %v265, %v266
    %268 = vst [vmem:[%s9] sm:$0x1] %v267
    // Predicated region
    $region50: #{fused_prompt_mlp.3} parent=1 // pred_check
      _
    $region51: #{fused_prompt_mlp.3} parent=1 // pred_check_branch
      %270 = sbr.rel (0) target = $region53
    $region52: #{fused_prompt_mlp.3} parent=1 // pred_region
      _
    $region53: #{fused_prompt_mlp.3} parent=1 // pred_fallthru
      _
    // Predicated region
    $region54: #{fused_prompt_mlp.3} parent=1 // pred_check
      _
    $region55: #{fused_prompt_mlp.3} parent=1 // pred_check_branch
      %272 = sbr.rel (0) target = $region57
    $region56: #{fused_prompt_mlp.3} parent=1 // pred_region
      _
    $region57: #{fused_prompt_mlp.3} parent=1 // pred_fallthru
      _
    // Predicated region
    $region58: #{fused_prompt_mlp.3} parent=1 // pred_check
      _
    $region59: #{fused_prompt_mlp.3} parent=1 // pred_check_branch
      %274 = sbr.rel (0) target = $region61
    $region60: #{fused_prompt_mlp.3} parent=1 // pred_region
      _
    $region61: #{fused_prompt_mlp.3} parent=1 // pred_fallthru
      _
    // Predicated region
    $region62: #{fused_prompt_mlp.3} parent=1 // pred_check
      _
    $region63: #{fused_prompt_mlp.3} parent=1 // pred_check_branch
      %276 = sbr.rel (0) target = $region65
    $region64: #{fused_prompt_mlp.3} parent=1 // pred_region
      _
    $region65: #{fused_prompt_mlp.3} parent=1 // pred_fallthru
      _
    %277 = vsyncpa [#allocation3], 1
    %278 = vsyncpa [#allocation5], 1
    %279 = vsyncpa [#allocation8], 1

</llo_original>
